<compile_context>
chip_gen: v6e
topology: v6e:2x2x1
jax: 0.10.0
libtpu: 0.0.40
codegen_flags: <defaults>
</compile_context>

<pallas_src>
import jax
import jax.numpy as jnp
from jax.experimental import pallas as pl
from jax.experimental.pallas import tpu as pltpu

IN_FEATURES = 64
OUT_FEATURES = 2

DEFAULT_TILE_ROWS = 32768        # un-folded rows per grid step (upper bound)
VMEM_TARGET_BYTES = 24 << 20     # double-buffered working-set target (fits every gen)
MIN_PALLAS_ROWS = 1024           # below this, plain XLA dot beats kernel launch cost


def _round_up(x, m):
    return ((x + m - 1) // m) * m


def _padded_bytes(rows, cols, itemsize):
    # VMEM footprint of a 2-D tile after (8, 128) sublane/lane padding.
    return _round_up(rows, 8) * _round_up(cols, 128) * itemsize


def _choose_fold(n):
    # Largest fold factor F dividing the batch, so (N,64)->(N/F,64F) is a free
    # row-major view.  F>=2 makes the contraction dim a multiple of 128.
    for f in (16, 8, 4, 2, 1):
        if n % f == 0:
            return f
    return 1


def _linear_kernel(x_ref, w_ref, b_ref, o_ref):
    # x_ref: (T, 64F)   w_ref: (64F, 2F) block-diagonal   b_ref: (1, 2F) f32
    # o_ref: (T, 2F)
    acc = jnp.dot(x_ref[...], w_ref[...], preferred_element_type=jnp.float32)
    o_ref[...] = (acc + b_ref[...]).astype(o_ref.dtype)


def classifier_forward(x, weight, bias, *, tile_rows=DEFAULT_TILE_ROWS):
    """nn.Linear(64, 2) forward: x @ weight.T + bias over the last dim.

    x: (..., 64); weight: (2, 64) (PyTorch layout); bias: (2,).
    """
    orig_shape = x.shape
    x2 = x.reshape(-1, IN_FEATURES)
    n = x2.shape[0]

    w_t = weight.T.astype(x2.dtype)                          # (64, 2)
    b_row = bias.reshape(1, OUT_FEATURES).astype(jnp.float32)

    if n < MIN_PALLAS_ROWS:
        # Small-N fast path: let XLA fuse the tiny projection into the producer.
        out = jnp.dot(x2, w_t, preferred_element_type=jnp.float32) + b_row
        return out.astype(x2.dtype).reshape(*orig_shape[:-1], OUT_FEATURES)

    # ---- lane-dense fold -----------------------------------------------------
    f = _choose_fold(n)
    k = IN_FEATURES * f                                      # folded contraction dim
    o = OUT_FEATURES * f                                      # folded output minor dim
    n_f = n // f

    x_f = x2.reshape(n_f, k)                                  # free (identical memory)
    w_bd = jnp.kron(jnp.eye(f, dtype=w_t.dtype), w_t)         # (64F, 2F) block-diagonal
    b_f = jnp.tile(b_row, (1, f))                             # (1, 2F), f32

    # ---- tile sizing from an explicit VMEM budget ------------------------------
    itemsize = jnp.dtype(x2.dtype).itemsize
    per_row_bytes = (_round_up(k, 128) + _round_up(o, 128)) * itemsize
    budget_rows = max(8, (VMEM_TARGET_BYTES // (2 * per_row_bytes)) // 8 * 8)
    t_cap = max(8, min(max(tile_rows // f, 8), budget_rows) // 8 * 8)
    # At least two grid steps so v7x's two TensorCores both get a share.
    t = min(t_cap, max(8, _round_up(pl.cdiv(n_f, 2), 8)))
    grid = (pl.cdiv(n_f, t),)                                  # ragged last block is masked

    vmem_limit = int(min(
        2 * (_padded_bytes(t, k, itemsize) + _padded_bytes(t, o, itemsize)
             + _padded_bytes(k, o, itemsize) + _padded_bytes(1, o, 4))
        + (8 << 20),
        48 << 20))

    cost = pl.CostEstimate(
        flops=2 * n_f * k * o,                                 # actual (block-diag) MXU flops
        bytes_accessed=(n * IN_FEATURES * itemsize             # read x once
                        + n * OUT_FEATURES * itemsize          # write out once
                        + k * o * itemsize + o * 4),           # resident weight + bias
        transcendentals=0,
    )

    out_f = pl.pallas_call(
        _linear_kernel,
        out_shape=jax.ShapeDtypeStruct((n_f, o), x2.dtype),
        grid_spec=pltpu.PrefetchScalarGridSpec(
            num_scalar_prefetch=0,
            grid=grid,
            in_specs=[
                pl.BlockSpec((t, k), lambda i: (i, 0)),        # streamed x tiles
                pl.BlockSpec((k, o), lambda i: (0, 0)),        # resident weight
                pl.BlockSpec((1, o), lambda i: (0, 0)),        # resident bias
            ],
            out_specs=pl.BlockSpec((t, o), lambda i: (i, 0)),
        ),
        compiler_params=pltpu.CompilerParams(
            dimension_semantics=("parallel",),                 # megacore split on v7x
            vmem_limit_bytes=vmem_limit,
        ),
        cost_estimate=cost,
    )(x_f, w_bd, b_f)

    return out_f.reshape(*orig_shape[:-1], OUT_FEATURES)


def init_params(key):
    # nn.Linear default init: uniform(+/- 1/sqrt(fan_in)).
    kw, kb = jax.random.split(key)
    bound = 1.0 / jnp.sqrt(jnp.float32(IN_FEATURES))
    weight = jax.random.uniform(
        kw, (OUT_FEATURES, IN_FEATURES), jnp.float32, -bound, bound)
    bias = jax.random.uniform(kb, (OUT_FEATURES,), jnp.float32, -bound, bound)
    return weight, bias


if __name__ == "__main__":
    key = jax.random.PRNGKey(0)
    k_small, k_param, k_big, k_odd = jax.random.split(key, 4)

    weight, bias = init_params(k_param)

    # Small batch (batch=8, features=64): fast path, matches the module spec.
    x = jax.random.normal(k_small, (8, IN_FEATURES), jnp.float32)
    out = jax.block_until_ready(classifier_forward(x, weight, bias))
    ref = x @ weight.T + bias
    assert out.shape == (8, OUT_FEATURES)
    assert jnp.allclose(out, ref, atol=1e-5, rtol=1e-5)

    # Large batch -> Pallas kernel (F=16 fold, ragged last block, no full pad).
    big_n = 10_000
    xb = jax.random.normal(k_big, (big_n, IN_FEATURES), jnp.float32)
    out_b = jax.block_until_ready(classifier_forward(xb, weight, bias))
    ref_b = xb @ weight.T + bias
    assert out_b.shape == (big_n, OUT_FEATURES)
    assert jnp.allclose(out_b, ref_b, atol=1e-4, rtol=1e-4)

    # Odd batch -> F=1 fallback path, still Pallas, still no full-array copy.
    odd_n = 4097
    xo = jax.random.normal(k_odd, (odd_n, IN_FEATURES), jnp.float32)
    out_o = jax.block_until_ready(classifier_forward(xo, weight, bias))
    ref_o = xo @ weight.T + bias
    assert out_o.shape == (odd_n, OUT_FEATURES)
    assert jnp.allclose(out_o, ref_o, atol=1e-4, rtol=1e-4)

    print("KERNEL_OK")
</pallas_src>

<mosaic_0001>
module attributes {stable_mosaic.version = 11 : i64} {
  func.func @_linear_kernel(%arg0: i32, %arg1: memref<320x1024xf32, #tpu.memory_space<vmem>>, %arg2: memref<1024x32xf32, #tpu.memory_space<vmem>>, %arg3: memref<1x32xf32, #tpu.memory_space<vmem>>, %arg4: memref<320x32xf32, #tpu.memory_space<vmem>>) attributes {dimension_semantics = [#tpu.dimension_semantics<parallel>], iteration_bounds = array<i64: 2>, scalar_prefetch = 0 : i64, scratch_operands = 0 : i64, tpu.core_type = #tpu.core_type<tc>, window_params = [{transform_indices = @transform_0, window_bounds = array<i64: 320, 1024>}, {pipeline_mode = #tpu.pipeline_mode<synchronous>, transform_indices = @transform_1, window_bounds = array<i64: 1024, 32>}, {pipeline_mode = #tpu.pipeline_mode<synchronous>, transform_indices = @transform_2, window_bounds = array<i64: 1, 32>}, {transform_indices = @transform_3, window_bounds = array<i64: 320, 32>}]} {
    %c0 = arith.constant 0 : index
    %c0_0 = arith.constant 0 : index
    %0 = vector.load %arg1[%c0, %c0_0] : memref<320x1024xf32, #tpu.memory_space<vmem>>, vector<320x1024xf32>
    %c0_1 = arith.constant 0 : index
    %c0_2 = arith.constant 0 : index
    %1 = vector.load %arg2[%c0_1, %c0_2] : memref<1024x32xf32, #tpu.memory_space<vmem>>, vector<1024x32xf32>
    %cst = arith.constant dense<0.000000e+00> : vector<320x32xf32>
    %2 = tpu.matmul %0, %1, %cst {dimension_numbers = #tpu.dot_dimension_numbers<[1], [0], [0], [1], [0, 0, 1, 1], [], []>} : vector<320x1024xf32>, vector<1024x32xf32>, vector<320x32xf32> -> vector<320x32xf32>
    %c0_3 = arith.constant 0 : index
    %c0_4 = arith.constant 0 : index
    %3 = vector.load %arg3[%c0_3, %c0_4] : memref<1x32xf32, #tpu.memory_space<vmem>>, vector<1x32xf32>
    %4 = vector.broadcast %3 : vector<1x32xf32> to vector<320x32xf32>
    %5 = arith.addf %2, %4 : vector<320x32xf32>
    %c0_5 = arith.constant 0 : index
    %c0_6 = arith.constant 0 : index
    %6 = vector.load %arg4[%c0_5, %c0_6] : memref<320x32xf32, #tpu.memory_space<vmem>>, vector<320x32xf32>
    tpu.vector_store %arg4[%c0_5, %c0_6], %5 {strides = array<i32>} : memref<320x32xf32, #tpu.memory_space<vmem>>, vector<320x32xf32>,
    return
  }
  func.func @transform_0(%arg0: i32) -> (i32, i32) {
    %c0_i32 = arith.constant 0 : i32
    %c0_i32_0 = arith.constant 0 : i32
    return %arg0, %c0_i32 : i32, i32
  }
  func.func @transform_1(%arg0: i32) -> (i32, i32) {
    %c0_i32 = arith.constant 0 : i32
    %c0_i32_0 = arith.constant 0 : i32
    %c0_i32_1 = arith.constant 0 : i32
    return %c0_i32, %c0_i32_0 : i32, i32
  }
  func.func @transform_2(%arg0: i32) -> (i32, i32) {
    %c0_i32 = arith.constant 0 : i32
    %c0_i32_0 = arith.constant 0 : i32
    %c0_i32_1 = arith.constant 0 : i32
    return %c0_i32, %c0_i32_0 : i32, i32
  }
  func.func @transform_3(%arg0: i32) -> (i32, i32) {
    %c0_i32 = arith.constant 0 : i32
    %c0_i32_0 = arith.constant 0 : i32
    return %arg0, %c0_i32 : i32, i32
  }
}

</mosaic_0001>

<llo_original>
// kernel: tpu_custom_call.1
$region0: #{tpu_custom_call.1}
  #allocation0 [shape = 'u32[]', space=smem, size = 0x4, offset = 0x4, fixed_abs, tag = 'smem constant byte address 0x4 - core index']
  #allocation1 [shape = 'u32[144,128]{1,0:T(1,128)}', space=vmem, size = 0x12000, scoped, tag = 'internal scratch']
  %s0 = inlined_call_operand.hbm [shape: f32[625,1024], index: 0, kind: input, shape index: {}]
  %s1 = inlined_call_operand.vmem [shape: f32[1024,32], index: 1, kind: input, shape index: {}]
  %s2 = inlined_call_operand.hbm [shape: f32[1,32], index: 2, kind: input, shape index: {}]
  %s3 = inlined_call_operand.vmem [shape: f32[625,32], index: 3, kind: output, shape index: {}]
  %s4 = sld [smem:[#allocation0]]
  $region101: #{tpu_custom_call.1} parent=0
    _
  %s6 = ssub.s32 1, %s4
  %s7 = scalar_select 0, %s6, %s4
  $region1: #{tpu_custom_call.1} parent=0
    #allocation2 [shape = 'u8[2621440]{0}', space=vmem, size = 0x280000, scoped, tag = 'input window, operand 0']
    #allocation3 [shape = 's32[2]{0}', space=sflag, size = 0x8, scoped, tag = 'scoped memory for tpu_custom_call.1']
    #allocation4 [shape = 'u8[512]{0}', space=vmem, size = 0x400, scoped, tag = 'input window, operand 2, single buffered']
    #allocation5 [shape = 's32[1]{0}', space=sflag, size = 0x4, scoped, tag = 'scoped memory for tpu_custom_call.1']
    #allocation6 [shape = 'u8[327680]{0}', space=vmem, size = 0x50000, scoped, tag = 'output window, operand 0']
    %8 = vsyncpa [#allocation3], 0
    %s9 = scalar_lea.sflag [#allocation3], 1
    %10 = vsyncpa %s9, 0
    %11 = vsyncpa [#allocation5], 0
    loop: start=0, step=1, limit=4
    $region2: #{tpu_custom_call.1} parent=1 // loop_pre_header
      _
    $region3: #{tpu_custom_call.1} parent=1 // loop_header
      %s13 = sphi 0, %s17
      %p14 = scmp.ge.s32.totalorder %s13, 4
      %s23 = sphi 0, %s25
      %s26 = sphi 0, %s23
      %s27 = sphi 0, %s26
      %s43 = sphi 0, %s27
      %s47 = sphi 0, %s47
      %s49 = sphi 0, %s47
      %s50 = sphi 0, %s49
      %s64 = sphi 0, %s50
      %s68 = sphi 0, %s68
      %s70 = sphi 0, %s68
      %s71 = sphi 0, %s70
      %s85 = sphi 0, %s71
      %s91 = sphi 0, %s93
      %s94 = sphi 0, %s91
      %s95 = sphi 0, %s94
      %s111 = sphi 0, %s95
    $region4: #{tpu_custom_call.1} parent=1 // loop_header_branch
      %16 = sbr.rel (%p14) target = $region8
    $region5: #{tpu_custom_call.1} parent=1 // loop_body
      %s18 = ssub.s32 %s13, 1
      %s19 = ssub.s32 %s13, 2
      %s20 = sadd.s32 %s13, 1
      %s21 = ssub.s32 %s13, %s20
      %p22 = scmp.eq.s32.totalorder %s21, 0
      %s24 = sadd.s32 %s23, 1
      %s25 = scalar_select %p22, %s23, %s24
      %p28 = pneg %p22
      %p29 = scmp.eq.s32.totalorder %s13, 1
      %p30 = por %p28, %p29
      %p31 = scmp.ne.s32.totalorder %s23, %s26
      %p32 = scmp.eq.s32.totalorder %s13, 0
      %p33 = por %p31, %p32
      %p34 = scmp.ne.s32.totalorder %s23, %s26
      %p35 = scmp.eq.s32.totalorder %s18, 1
      %p36 = por %p34, %p35
      %p37 = scmp.ne.s32.totalorder %s26, %s27
      %p38 = scmp.eq.s32.totalorder %s18, 0
      %p39 = por %p37, %p38
      %p40 = scmp.ne.s32.totalorder %s26, %s27
      %p41 = scmp.eq.s32.totalorder %s19, 1
      %p42 = por %p40, %p41
      %p44 = scmp.ne.s32.totalorder %s27, %s43
      %p45 = scmp.eq.s32.totalorder %s19, 0
      %p46 = por %p44, %p45
      %s48 = sadd.s32 %s47, 1
      %p51 = scmp.eq.s32.totalorder %s13, 1
      %p52 = scmp.ne.s32.totalorder %s47, %s49
      %p53 = scmp.eq.s32.totalorder %s13, 0
      %p54 = por %p52, %p53
      %p55 = scmp.ne.s32.totalorder %s47, %s49
      %p56 = scmp.eq.s32.totalorder %s18, 1
      %p57 = por %p55, %p56
      %p58 = scmp.ne.s32.totalorder %s49, %s50
      %p59 = scmp.eq.s32.totalorder %s18, 0
      %p60 = por %p58, %p59
      %p61 = scmp.ne.s32.totalorder %s49, %s50
      %p62 = scmp.eq.s32.totalorder %s19, 1
      %p63 = por %p61, %p62
      %p65 = scmp.ne.s32.totalorder %s50, %s64
      %p66 = scmp.eq.s32.totalorder %s19, 0
      %p67 = por %p65, %p66
      %s69 = sadd.s32 %s68, 1
      %p72 = scmp.eq.s32.totalorder %s13, 1
      %p73 = scmp.ne.s32.totalorder %s68, %s70
      %p74 = scmp.eq.s32.totalorder %s13, 0
      %p75 = por %p73, %p74
      %p76 = scmp.ne.s32.totalorder %s68, %s70
      %p77 = scmp.eq.s32.totalorder %s18, 1
      %p78 = por %p76, %p77
      %p79 = scmp.ne.s32.totalorder %s70, %s71
      %p80 = scmp.eq.s32.totalorder %s18, 0
      %p81 = por %p79, %p80
      %p82 = scmp.ne.s32.totalorder %s70, %s71
      %p83 = scmp.eq.s32.totalorder %s19, 1
      %p84 = por %p82, %p83
      %p86 = scmp.ne.s32.totalorder %s71, %s85
      %p87 = scmp.eq.s32.totalorder %s19, 0
      %p88 = por %p86, %p87
      %s89 = ssub.s32 %s13, %s20
      %p90 = scmp.eq.s32.totalorder %s89, 0
      %s92 = sadd.s32 %s91, 1
      %s93 = scalar_select %p90, %s91, %s92
      %p96 = pneg %p90
      %p97 = scmp.eq.s32.totalorder %s13, 1
      %p98 = por %p96, %p97
      %p99 = scmp.ne.s32.totalorder %s91, %s94
      %p100 = scmp.eq.s32.totalorder %s13, 0
      %p101 = por %p99, %p100
      %p102 = scmp.ne.s32.totalorder %s91, %s94
      %p103 = scmp.eq.s32.totalorder %s18, 1
      %p104 = por %p102, %p103
      %p105 = scmp.ne.s32.totalorder %s94, %s95
      %p106 = scmp.eq.s32.totalorder %s18, 0
      %p107 = por %p105, %p106
      %p108 = scmp.ne.s32.totalorder %s94, %s95
      %p109 = scmp.eq.s32.totalorder %s19, 1
      %p110 = por %p108, %p109
      %p112 = scmp.ne.s32.totalorder %s95, %s111
      %p113 = scmp.eq.s32.totalorder %s19, 0
      %p114 = por %p112, %p113
      %p115 = scmp.le.s32.totalorder 1, %s13
      %p116 = scmp.lt.s32.totalorder %s13, 3
      %p117 = pnand %p115, %p116
      %p118 = pneg %p117
      // Predicated region
      $region9: #{tpu_custom_call.1} parent=5 // pred_check
        _
      $region10: #{tpu_custom_call.1} parent=5 // pred_check_branch
        %120 = sbr.rel (%p117) target = $region12
      $region11: #{tpu_custom_call.1} parent=5 // pred_region
        %s121 = ssub.s32 %s13, 1
        // Predicated region
        $region13: #{tpu_custom_call.1} parent=11 // pred_check
          %p122 = pneg %p60
        $region14: #{tpu_custom_call.1} parent=11 // pred_check_branch
          %124 = sbr.rel (%p122) target = $region16
        $region15: #{tpu_custom_call.1} parent=11 // pred_region
          _
        $region16: #{tpu_custom_call.1} parent=11 // pred_fallthru
          _
        // Predicated region
        $region17: #{tpu_custom_call.1} parent=11 // pred_check
          %p125 = pneg %p81
        $region18: #{tpu_custom_call.1} parent=11 // pred_check_branch
          %127 = sbr.rel (%p125) target = $region20
        $region19: #{tpu_custom_call.1} parent=11 // pred_region
          %s129 = ssub.s32 16, 16
          %130 = vsyncadd [#allocation5], %s129
          %s132 = sshll.u32 [#allocation4], 4
          %s133 = int_to_ptr.vmem [resolvable:$true] %s132
          %135 = dma.hbm_to_vmem [thread:$0]  %s2, 16, %s133, [#allocation5]
        $region20: #{tpu_custom_call.1} parent=11 // pred_fallthru
          _
      $region12: #{tpu_custom_call.1} parent=5 // pred_fallthru
        _
      %p136 = scmp.lt.s32.totalorder %s13, 2
      // Predicated region
      $region21: #{tpu_custom_call.1} parent=5 // pred_check
        %p137 = pneg %p136
      $region22: #{tpu_custom_call.1} parent=5 // pred_check_branch
        %139 = sbr.rel (%p137) target = $region24
      $region23: #{tpu_custom_call.1} parent=5 // pred_region
        // Predicated region
        $region25: #{tpu_custom_call.1} parent=23 // pred_check
          %p140 = pneg %p33
        $region26: #{tpu_custom_call.1} parent=23 // pred_check_branch
          %142 = sbr.rel (%p140) target = $region28
        $region27: #{tpu_custom_call.1} parent=23 // pred_region
          %s143 = sand.u32 %s23, 1
          %s144 = scalar_lea.sflag [#allocation3], %s143
          %s145 = sand.u32 %s23, 1
          %s146 = smul.addr %s145, 2560
          %s147 = scalar_lea.vmem [#allocation2], %s146
          %s148 = smul.u32 40, %s13
          %s149 = ssub.s32 79, %s148
          %p150 = scmp.lt.s32.totalorder %s149, 40
          %s151 = scalar_select %p150, %s149, 40
          %s152 = smul.u32 128, %s151
          %s153 = smul.u32 %s152, 8
          %s155 = ssub.s32 40960, %s153
          %156 = vsyncadd %s144, %s155
          %p157 = scmp.ne.s32.totalorder 0, %s153
          %s158 = smul.addr %s148, 8
          %s159 = smul.addr %s158, 128
          %s160 = scalar_lea.hbm %s0, %s159
          %s161 = smul.u32 64, %s151
          %s162 = sshll.u32 %s147, 4
          %s163 = int_to_ptr.vmem [resolvable:$true] %s162
          %s164 = sshll.u32 %s161, 4
          %168 = dma.hbm_to_vmem [thread:$0]  (%p157), %s160, %s164, %s163, %s144, 1024, 1024, 64
        $region28: #{tpu_custom_call.1} parent=23 // pred_fallthru
          _
      $region24: #{tpu_custom_call.1} parent=5 // pred_fallthru
        _
      %p169 = scmp.le.s32.totalorder 1, %s13
      %p170 = scmp.lt.s32.totalorder %s13, 3
      %p171 = pnand %p169, %p170
      %p172 = pneg %p171
      // Predicated region
      $region29: #{tpu_custom_call.1} parent=5 // pred_check
        _
      $region30: #{tpu_custom_call.1} parent=5 // pred_check_branch
        %174 = sbr.rel (%p171) target = $region32
      $region31: #{tpu_custom_call.1} parent=5 // pred_region
        %s175 = ssub.s32 %s13, 1
        %s176 = sand.u32 %s26, 1
        %s177 = scalar_lea.sflag [#allocation3], %s176
        %s178 = sand.u32 %s26, 1
        %s179 = smul.addr %s178, 2560
        %s180 = scalar_lea.vmem [#allocation2], %s179
        // Predicated region
        $region33: #{tpu_custom_call.1} parent=31 // pred_check
          %p181 = pneg %p39
        $region34: #{tpu_custom_call.1} parent=31 // pred_check_branch
          %183 = sbr.rel (%p181) target = $region36
        $region35: #{tpu_custom_call.1} parent=31 // pred_region
          %184 = dma.done %s177, 40960
        $region36: #{tpu_custom_call.1} parent=31 // pred_fallthru
          _
        // Predicated region
        $region37: #{tpu_custom_call.1} parent=31 // pred_check
          %p185 = pneg %p81
        $region38: #{tpu_custom_call.1} parent=31 // pred_check_branch
          %187 = sbr.rel (%p185) target = $region40
        $region39: #{tpu_custom_call.1} parent=31 // pred_region
          %188 = dma.done [#allocation5], 16
        $region40: #{tpu_custom_call.1} parent=31 // pred_fallthru
          _
        %s189 = sand.u32 %s26, 1
        %s190 = scalar_lea.sflag [#allocation3], %s189
        %s191 = sand.u32 %s26, 1
        %s192 = smul.addr %s191, 2560
        %s193 = scalar_lea.vmem [#allocation2], %s192
        %p194 = pneg %p39
        %p195 = pneg %p36
        %p196 = pneg %p60
        %p197 = pneg %p57
        %p198 = pneg %p81
        %p199 = pneg %p78
        %p200 = pneg %p107
        %p201 = pneg %p104
        %s202 = sand.u32 %s94, 1
        %s203 = sand.u32 %s94, 1
        %s204 = smul.addr %s203, 320
        %s205 = scalar_lea.vmem [#allocation6], %s204
        %s206 = smul.u32 40, %s18
        %s207 = ssub.s32 79, %s206
        %p208 = scmp.lt.s32.totalorder %s207, 40
        %s209 = scalar_select %p208, %s207, 40
        %s210 = smul.u32 128, %s209
        %s211 = smul.u32 %s210, 8
        %s212 = smul.u32 40, %s18
        %s213 = ssub.s32 79, %s212
        %p214 = scmp.lt.s32.totalorder %s213, 40
        %s215 = scalar_select %p214, %s213, 40
        %s216 = smul.u32 128, %s215
        %v217 = vld [vmem:[%s180] sm:$0xff]
        %v218 = vld [vmem:[%s180 + $0x8] sm:$0xff]
        %v219 = vld [vmem:[%s180 + $0x10] sm:$0xff]
        %v220 = vld [vmem:[%s180 + $0x18] sm:$0xff]
        %v221 = vld [vmem:[%s180 + $0x20] sm:$0xff]
        %v222 = vld [vmem:[%s180 + $0x28] sm:$0xff]
        %v223 = vld [vmem:[%s180 + $0x30] sm:$0xff]
        %v224 = vld [vmem:[%s180 + $0x38] sm:$0xff]
        %v225 = vld [vmem:[%s180 + $0x40] sm:$0xff]
        %v226 = vld [vmem:[%s180 + $0x48] sm:$0xff]
        %v227 = vld [vmem:[%s180 + $0x50] sm:$0xff]
        %v228 = vld [vmem:[%s180 + $0x58] sm:$0xff]
        %v229 = vld [vmem:[%s180 + $0x60] sm:$0xff]
        %v230 = vld [vmem:[%s180 + $0x68] sm:$0xff]
        %v231 = vld [vmem:[%s180 + $0x70] sm:$0xff]
        %v232 = vld [vmem:[%s180 + $0x78] sm:$0xff]
        %v233 = vld [vmem:[%s180 + $0x80] sm:$0xff]
        %v234 = vld [vmem:[%s180 + $0x88] sm:$0xff]
        %v235 = vld [vmem:[%s180 + $0x90] sm:$0xff]
        %v236 = vld [vmem:[%s180 + $0x98] sm:$0xff]
        %v237 = vld [vmem:[%s180 + $0xa0] sm:$0xff]
        %v238 = vld [vmem:[%s180 + $0xa8] sm:$0xff]
        %v239 = vld [vmem:[%s180 + $0xb0] sm:$0xff]
        %v240 = vld [vmem:[%s180 + $0xb8] sm:$0xff]
        %v241 = vld [vmem:[%s180 + $0xc0] sm:$0xff]
        %v242 = vld [vmem:[%s180 + $0xc8] sm:$0xff]
        %v243 = vld [vmem:[%s180 + $0xd0] sm:$0xff]
        %v244 = vld [vmem:[%s180 + $0xd8] sm:$0xff]
        %v245 = vld [vmem:[%s180 + $0xe0] sm:$0xff]
        %v246 = vld [vmem:[%s180 + $0xe8] sm:$0xff]
        %v247 = vld [vmem:[%s180 + $0xf0] sm:$0xff]
        %v248 = vld [vmem:[%s180 + $0xf8] sm:$0xff]
        %v249 = vld [vmem:[%s180 + $0x100] sm:$0xff]
        %v250 = vld [vmem:[%s180 + $0x108] sm:$0xff]
        %v251 = vld [vmem:[%s180 + $0x110] sm:$0xff]
        %v252 = vld [vmem:[%s180 + $0x118] sm:$0xff]
        %v253 = vld [vmem:[%s180 + $0x120] sm:$0xff]
        %v254 = vld [vmem:[%s180 + $0x128] sm:$0xff]
        %v255 = vld [vmem:[%s180 + $0x130] sm:$0xff]
        %v256 = vld [vmem:[%s180 + $0x138] sm:$0xff]
        %v257 = vld [vmem:[%s180 + $0x140] sm:$0xff]
        %v258 = vld [vmem:[%s180 + $0x148] sm:$0xff]
        %v259 = vld [vmem:[%s180 + $0x150] sm:$0xff]
        %v260 = vld [vmem:[%s180 + $0x158] sm:$0xff]
        %v261 = vld [vmem:[%s180 + $0x160] sm:$0xff]
        %v262 = vld [vmem:[%s180 + $0x168] sm:$0xff]
        %v263 = vld [vmem:[%s180 + $0x170] sm:$0xff]
        %v264 = vld [vmem:[%s180 + $0x178] sm:$0xff]
        %v265 = vld [vmem:[%s180 + $0x180] sm:$0xff]
        %v266 = vld [vmem:[%s180 + $0x188] sm:$0xff]
        %v267 = vld [vmem:[%s180 + $0x190] sm:$0xff]
        %v268 = vld [vmem:[%s180 + $0x198] sm:$0xff]
        %v269 = vld [vmem:[%s180 + $0x1a0] sm:$0xff]
        %v270 = vld [vmem:[%s180 + $0x1a8] sm:$0xff]
        %v271 = vld [vmem:[%s180 + $0x1b0] sm:$0xff]
        %v272 = vld [vmem:[%s180 + $0x1b8] sm:$0xff]
        %v273 = vld [vmem:[%s180 + $0x1c0] sm:$0xff]
        %v274 = vld [vmem:[%s180 + $0x1c8] sm:$0xff]
        %v275 = vld [vmem:[%s180 + $0x1d0] sm:$0xff]
        %v276 = vld [vmem:[%s180 + $0x1d8] sm:$0xff]
        %v277 = vld [vmem:[%s180 + $0x1e0] sm:$0xff]
        %v278 = vld [vmem:[%s180 + $0x1e8] sm:$0xff]
        %v279 = vld [vmem:[%s180 + $0x1f0] sm:$0xff]
        %v280 = vld [vmem:[%s180 + $0x1f8] sm:$0xff]
        %v281 = vld [vmem:[%s180 + $0x200] sm:$0xff]
        %v282 = vld [vmem:[%s180 + $0x208] sm:$0xff]
        %v283 = vld [vmem:[%s180 + $0x210] sm:$0xff]
        %v284 = vld [vmem:[%s180 + $0x218] sm:$0xff]
        %v285 = vld [vmem:[%s180 + $0x220] sm:$0xff]
        %v286 = vld [vmem:[%s180 + $0x228] sm:$0xff]
        %v287 = vld [vmem:[%s180 + $0x230] sm:$0xff]
        %v288 = vld [vmem:[%s180 + $0x238] sm:$0xff]
        %v289 = vld [vmem:[%s180 + $0x240] sm:$0xff]
        %v290 = vld [vmem:[%s180 + $0x248] sm:$0xff]
        %v291 = vld [vmem:[%s180 + $0x250] sm:$0xff]
        %v292 = vld [vmem:[%s180 + $0x258] sm:$0xff]
        %v293 = vld [vmem:[%s180 + $0x260] sm:$0xff]
        %v294 = vld [vmem:[%s180 + $0x268] sm:$0xff]
        %v295 = vld [vmem:[%s180 + $0x270] sm:$0xff]
        %v296 = vld [vmem:[%s180 + $0x278] sm:$0xff]
        %v297 = vld [vmem:[%s180 + $0x280] sm:$0xff]
        %v298 = vld [vmem:[%s180 + $0x288] sm:$0xff]
        %v299 = vld [vmem:[%s180 + $0x290] sm:$0xff]
        %v300 = vld [vmem:[%s180 + $0x298] sm:$0xff]
        %v301 = vld [vmem:[%s180 + $0x2a0] sm:$0xff]
        %v302 = vld [vmem:[%s180 + $0x2a8] sm:$0xff]
        %v303 = vld [vmem:[%s180 + $0x2b0] sm:$0xff]
        %v304 = vld [vmem:[%s180 + $0x2b8] sm:$0xff]
        %v305 = vld [vmem:[%s180 + $0x2c0] sm:$0xff]
        %v306 = vld [vmem:[%s180 + $0x2c8] sm:$0xff]
        %v307 = vld [vmem:[%s180 + $0x2d0] sm:$0xff]
        %v308 = vld [vmem:[%s180 + $0x2d8] sm:$0xff]
        %v309 = vld [vmem:[%s180 + $0x2e0] sm:$0xff]
        %v310 = vld [vmem:[%s180 + $0x2e8] sm:$0xff]
        %v311 = vld [vmem:[%s180 + $0x2f0] sm:$0xff]
        %v312 = vld [vmem:[%s180 + $0x2f8] sm:$0xff]
        %v313 = vld [vmem:[%s180 + $0x300] sm:$0xff]
        %v314 = vld [vmem:[%s180 + $0x308] sm:$0xff]
        %v315 = vld [vmem:[%s180 + $0x310] sm:$0xff]
        %v316 = vld [vmem:[%s180 + $0x318] sm:$0xff]
        %v317 = vld [vmem:[%s180 + $0x320] sm:$0xff]
        %v318 = vld [vmem:[%s180 + $0x328] sm:$0xff]
        %v319 = vld [vmem:[%s180 + $0x330] sm:$0xff]
        %v320 = vld [vmem:[%s180 + $0x338] sm:$0xff]
        %v321 = vld [vmem:[%s180 + $0x340] sm:$0xff]
        %v322 = vld [vmem:[%s180 + $0x348] sm:$0xff]
        %v323 = vld [vmem:[%s180 + $0x350] sm:$0xff]
        %v324 = vld [vmem:[%s180 + $0x358] sm:$0xff]
        %v325 = vld [vmem:[%s180 + $0x360] sm:$0xff]
        %v326 = vld [vmem:[%s180 + $0x368] sm:$0xff]
        %v327 = vld [vmem:[%s180 + $0x370] sm:$0xff]
        %v328 = vld [vmem:[%s180 + $0x378] sm:$0xff]
        %v329 = vld [vmem:[%s180 + $0x380] sm:$0xff]
        %v330 = vld [vmem:[%s180 + $0x388] sm:$0xff]
        %v331 = vld [vmem:[%s180 + $0x390] sm:$0xff]
        %v332 = vld [vmem:[%s180 + $0x398] sm:$0xff]
        %v333 = vld [vmem:[%s180 + $0x3a0] sm:$0xff]
        %v334 = vld [vmem:[%s180 + $0x3a8] sm:$0xff]
        %v335 = vld [vmem:[%s180 + $0x3b0] sm:$0xff]
        %v336 = vld [vmem:[%s180 + $0x3b8] sm:$0xff]
        %v337 = vld [vmem:[%s180 + $0x3c0] sm:$0xff]
        %v338 = vld [vmem:[%s180 + $0x3c8] sm:$0xff]
        %v339 = vld [vmem:[%s180 + $0x3d0] sm:$0xff]
        %v340 = vld [vmem:[%s180 + $0x3d8] sm:$0xff]
        %v341 = vld [vmem:[%s180 + $0x3e0] sm:$0xff]
        %v342 = vld [vmem:[%s180 + $0x3e8] sm:$0xff]
        %v343 = vld [vmem:[%s180 + $0x3f0] sm:$0xff]
        %v344 = vld [vmem:[%s180 + $0x3f8] sm:$0xff]
        %v345 = vld [vmem:[%s180 + $0x400] sm:$0xff]
        %v346 = vld [vmem:[%s180 + $0x408] sm:$0xff]
        %v347 = vld [vmem:[%s180 + $0x410] sm:$0xff]
        %v348 = vld [vmem:[%s180 + $0x418] sm:$0xff]
        %v349 = vld [vmem:[%s180 + $0x420] sm:$0xff]
        %v350 = vld [vmem:[%s180 + $0x428] sm:$0xff]
        %v351 = vld [vmem:[%s180 + $0x430] sm:$0xff]
        %v352 = vld [vmem:[%s180 + $0x438] sm:$0xff]
        %v353 = vld [vmem:[%s180 + $0x440] sm:$0xff]
        %v354 = vld [vmem:[%s180 + $0x448] sm:$0xff]
        %v355 = vld [vmem:[%s180 + $0x450] sm:$0xff]
        %v356 = vld [vmem:[%s180 + $0x458] sm:$0xff]
        %v357 = vld [vmem:[%s180 + $0x460] sm:$0xff]
        %v358 = vld [vmem:[%s180 + $0x468] sm:$0xff]
        %v359 = vld [vmem:[%s180 + $0x470] sm:$0xff]
        %v360 = vld [vmem:[%s180 + $0x478] sm:$0xff]
        %v361 = vld [vmem:[%s180 + $0x480] sm:$0xff]
        %v362 = vld [vmem:[%s180 + $0x488] sm:$0xff]
        %v363 = vld [vmem:[%s180 + $0x490] sm:$0xff]
        %v364 = vld [vmem:[%s180 + $0x498] sm:$0xff]
        %v365 = vld [vmem:[%s180 + $0x4a0] sm:$0xff]
        %v366 = vld [vmem:[%s180 + $0x4a8] sm:$0xff]
        %v367 = vld [vmem:[%s180 + $0x4b0] sm:$0xff]
        %v368 = vld [vmem:[%s180 + $0x4b8] sm:$0xff]
        %v369 = vld [vmem:[%s180 + $0x4c0] sm:$0xff]
        %v370 = vld [vmem:[%s180 + $0x4c8] sm:$0xff]
        %v371 = vld [vmem:[%s180 + $0x4d0] sm:$0xff]
        %v372 = vld [vmem:[%s180 + $0x4d8] sm:$0xff]
        %v373 = vld [vmem:[%s180 + $0x4e0] sm:$0xff]
        %v374 = vld [vmem:[%s180 + $0x4e8] sm:$0xff]
        %v375 = vld [vmem:[%s180 + $0x4f0] sm:$0xff]
        %v376 = vld [vmem:[%s180 + $0x4f8] sm:$0xff]
        %v377 = vld [vmem:[%s180 + $0x500] sm:$0xff]
        %v378 = vld [vmem:[%s180 + $0x508] sm:$0xff]
        %v379 = vld [vmem:[%s180 + $0x510] sm:$0xff]
        %v380 = vld [vmem:[%s180 + $0x518] sm:$0xff]
        %v381 = vld [vmem:[%s180 + $0x520] sm:$0xff]
        %v382 = vld [vmem:[%s180 + $0x528] sm:$0xff]
        %v383 = vld [vmem:[%s180 + $0x530] sm:$0xff]
        %v384 = vld [vmem:[%s180 + $0x538] sm:$0xff]
        %v385 = vld [vmem:[%s180 + $0x540] sm:$0xff]
        %v386 = vld [vmem:[%s180 + $0x548] sm:$0xff]
        %v387 = vld [vmem:[%s180 + $0x550] sm:$0xff]
        %v388 = vld [vmem:[%s180 + $0x558] sm:$0xff]
        %v389 = vld [vmem:[%s180 + $0x560] sm:$0xff]
        %v390 = vld [vmem:[%s180 + $0x568] sm:$0xff]
        %v391 = vld [vmem:[%s180 + $0x570] sm:$0xff]
        %v392 = vld [vmem:[%s180 + $0x578] sm:$0xff]
        %v393 = vld [vmem:[%s180 + $0x580] sm:$0xff]
        %v394 = vld [vmem:[%s180 + $0x588] sm:$0xff]
        %v395 = vld [vmem:[%s180 + $0x590] sm:$0xff]
        %v396 = vld [vmem:[%s180 + $0x598] sm:$0xff]
        %v397 = vld [vmem:[%s180 + $0x5a0] sm:$0xff]
        %v398 = vld [vmem:[%s180 + $0x5a8] sm:$0xff]
        %v399 = vld [vmem:[%s180 + $0x5b0] sm:$0xff]
        %v400 = vld [vmem:[%s180 + $0x5b8] sm:$0xff]
        %v401 = vld [vmem:[%s180 + $0x5c0] sm:$0xff]
        %v402 = vld [vmem:[%s180 + $0x5c8] sm:$0xff]
        %v403 = vld [vmem:[%s180 + $0x5d0] sm:$0xff]
        %v404 = vld [vmem:[%s180 + $0x5d8] sm:$0xff]
        %v405 = vld [vmem:[%s180 + $0x5e0] sm:$0xff]
        %v406 = vld [vmem:[%s180 + $0x5e8] sm:$0xff]
        %v407 = vld [vmem:[%s180 + $0x5f0] sm:$0xff]
        %v408 = vld [vmem:[%s180 + $0x5f8] sm:$0xff]
        %v409 = vld [vmem:[%s180 + $0x600] sm:$0xff]
        %v410 = vld [vmem:[%s180 + $0x608] sm:$0xff]
        %v411 = vld [vmem:[%s180 + $0x610] sm:$0xff]
        %v412 = vld [vmem:[%s180 + $0x618] sm:$0xff]
        %v413 = vld [vmem:[%s180 + $0x620] sm:$0xff]
        %v414 = vld [vmem:[%s180 + $0x628] sm:$0xff]
        %v415 = vld [vmem:[%s180 + $0x630] sm:$0xff]
        %v416 = vld [vmem:[%s180 + $0x638] sm:$0xff]
        %v417 = vld [vmem:[%s180 + $0x640] sm:$0xff]
        %v418 = vld [vmem:[%s180 + $0x648] sm:$0xff]
        %v419 = vld [vmem:[%s180 + $0x650] sm:$0xff]
        %v420 = vld [vmem:[%s180 + $0x658] sm:$0xff]
        %v421 = vld [vmem:[%s180 + $0x660] sm:$0xff]
        %v422 = vld [vmem:[%s180 + $0x668] sm:$0xff]
        %v423 = vld [vmem:[%s180 + $0x670] sm:$0xff]
        %v424 = vld [vmem:[%s180 + $0x678] sm:$0xff]
        %v425 = vld [vmem:[%s180 + $0x680] sm:$0xff]
        %v426 = vld [vmem:[%s180 + $0x688] sm:$0xff]
        %v427 = vld [vmem:[%s180 + $0x690] sm:$0xff]
        %v428 = vld [vmem:[%s180 + $0x698] sm:$0xff]
        %v429 = vld [vmem:[%s180 + $0x6a0] sm:$0xff]
        %v430 = vld [vmem:[%s180 + $0x6a8] sm:$0xff]
        %v431 = vld [vmem:[%s180 + $0x6b0] sm:$0xff]
        %v432 = vld [vmem:[%s180 + $0x6b8] sm:$0xff]
        %v433 = vld [vmem:[%s180 + $0x6c0] sm:$0xff]
        %v434 = vld [vmem:[%s180 + $0x6c8] sm:$0xff]
        %v435 = vld [vmem:[%s180 + $0x6d0] sm:$0xff]
        %v436 = vld [vmem:[%s180 + $0x6d8] sm:$0xff]
        %v437 = vld [vmem:[%s180 + $0x6e0] sm:$0xff]
        %v438 = vld [vmem:[%s180 + $0x6e8] sm:$0xff]
        %v439 = vld [vmem:[%s180 + $0x6f0] sm:$0xff]
        %v440 = vld [vmem:[%s180 + $0x6f8] sm:$0xff]
        %v441 = vld [vmem:[%s180 + $0x700] sm:$0xff]
        %v442 = vld [vmem:[%s180 + $0x708] sm:$0xff]
        %v443 = vld [vmem:[%s180 + $0x710] sm:$0xff]
        %v444 = vld [vmem:[%s180 + $0x718] sm:$0xff]
        %v445 = vld [vmem:[%s180 + $0x720] sm:$0xff]
        %v446 = vld [vmem:[%s180 + $0x728] sm:$0xff]
        %v447 = vld [vmem:[%s180 + $0x730] sm:$0xff]
        %v448 = vld [vmem:[%s180 + $0x738] sm:$0xff]
        %v449 = vld [vmem:[%s180 + $0x740] sm:$0xff]
        %v450 = vld [vmem:[%s180 + $0x748] sm:$0xff]
        %v451 = vld [vmem:[%s180 + $0x750] sm:$0xff]
        %v452 = vld [vmem:[%s180 + $0x758] sm:$0xff]
        %v453 = vld [vmem:[%s180 + $0x760] sm:$0xff]
        %v454 = vld [vmem:[%s180 + $0x768] sm:$0xff]
        %v455 = vld [vmem:[%s180 + $0x770] sm:$0xff]
        %v456 = vld [vmem:[%s180 + $0x778] sm:$0xff]
        %v457 = vld [vmem:[%s180 + $0x780] sm:$0xff]
        %v458 = vld [vmem:[%s180 + $0x788] sm:$0xff]
        %v459 = vld [vmem:[%s180 + $0x790] sm:$0xff]
        %v460 = vld [vmem:[%s180 + $0x798] sm:$0xff]
        %v461 = vld [vmem:[%s180 + $0x7a0] sm:$0xff]
        %v462 = vld [vmem:[%s180 + $0x7a8] sm:$0xff]
        %v463 = vld [vmem:[%s180 + $0x7b0] sm:$0xff]
        %v464 = vld [vmem:[%s180 + $0x7b8] sm:$0xff]
        %v465 = vld [vmem:[%s180 + $0x7c0] sm:$0xff]
        %v466 = vld [vmem:[%s180 + $0x7c8] sm:$0xff]
        %v467 = vld [vmem:[%s180 + $0x7d0] sm:$0xff]
        %v468 = vld [vmem:[%s180 + $0x7d8] sm:$0xff]
        %v469 = vld [vmem:[%s180 + $0x7e0] sm:$0xff]
        %v470 = vld [vmem:[%s180 + $0x7e8] sm:$0xff]
        %v471 = vld [vmem:[%s180 + $0x7f0] sm:$0xff]
        %v472 = vld [vmem:[%s180 + $0x7f8] sm:$0xff]
        %v473 = vld [vmem:[%s180 + $0x800] sm:$0xff]
        %v474 = vld [vmem:[%s180 + $0x808] sm:$0xff]
        %v475 = vld [vmem:[%s180 + $0x810] sm:$0xff]
        %v476 = vld [vmem:[%s180 + $0x818] sm:$0xff]
        %v477 = vld [vmem:[%s180 + $0x820] sm:$0xff]
        %v478 = vld [vmem:[%s180 + $0x828] sm:$0xff]
        %v479 = vld [vmem:[%s180 + $0x830] sm:$0xff]
        %v480 = vld [vmem:[%s180 + $0x838] sm:$0xff]
        %v481 = vld [vmem:[%s180 + $0x840] sm:$0xff]
        %v482 = vld [vmem:[%s180 + $0x848] sm:$0xff]
        %v483 = vld [vmem:[%s180 + $0x850] sm:$0xff]
        %v484 = vld [vmem:[%s180 + $0x858] sm:$0xff]
        %v485 = vld [vmem:[%s180 + $0x860] sm:$0xff]
        %v486 = vld [vmem:[%s180 + $0x868] sm:$0xff]
        %v487 = vld [vmem:[%s180 + $0x870] sm:$0xff]
        %v488 = vld [vmem:[%s180 + $0x878] sm:$0xff]
        %v489 = vld [vmem:[%s180 + $0x880] sm:$0xff]
        %v490 = vld [vmem:[%s180 + $0x888] sm:$0xff]
        %v491 = vld [vmem:[%s180 + $0x890] sm:$0xff]
        %v492 = vld [vmem:[%s180 + $0x898] sm:$0xff]
        %v493 = vld [vmem:[%s180 + $0x8a0] sm:$0xff]
        %v494 = vld [vmem:[%s180 + $0x8a8] sm:$0xff]
        %v495 = vld [vmem:[%s180 + $0x8b0] sm:$0xff]
        %v496 = vld [vmem:[%s180 + $0x8b8] sm:$0xff]
        %v497 = vld [vmem:[%s180 + $0x8c0] sm:$0xff]
        %v498 = vld [vmem:[%s180 + $0x8c8] sm:$0xff]
        %v499 = vld [vmem:[%s180 + $0x8d0] sm:$0xff]
        %v500 = vld [vmem:[%s180 + $0x8d8] sm:$0xff]
        %v501 = vld [vmem:[%s180 + $0x8e0] sm:$0xff]
        %v502 = vld [vmem:[%s180 + $0x8e8] sm:$0xff]
        %v503 = vld [vmem:[%s180 + $0x8f0] sm:$0xff]
        %v504 = vld [vmem:[%s180 + $0x8f8] sm:$0xff]
        %v505 = vld [vmem:[%s180 + $0x900] sm:$0xff]
        %v506 = vld [vmem:[%s180 + $0x908] sm:$0xff]
        %v507 = vld [vmem:[%s180 + $0x910] sm:$0xff]
        %v508 = vld [vmem:[%s180 + $0x918] sm:$0xff]
        %v509 = vld [vmem:[%s180 + $0x920] sm:$0xff]
        %v510 = vld [vmem:[%s180 + $0x928] sm:$0xff]
        %v511 = vld [vmem:[%s180 + $0x930] sm:$0xff]
        %v512 = vld [vmem:[%s180 + $0x938] sm:$0xff]
        %v513 = vld [vmem:[%s180 + $0x940] sm:$0xff]
        %v514 = vld [vmem:[%s180 + $0x948] sm:$0xff]
        %v515 = vld [vmem:[%s180 + $0x950] sm:$0xff]
        %v516 = vld [vmem:[%s180 + $0x958] sm:$0xff]
        %v517 = vld [vmem:[%s180 + $0x960] sm:$0xff]
        %v518 = vld [vmem:[%s180 + $0x968] sm:$0xff]
        %v519 = vld [vmem:[%s180 + $0x970] sm:$0xff]
        %v520 = vld [vmem:[%s180 + $0x978] sm:$0xff]
        %v521 = vld [vmem:[%s180 + $0x980] sm:$0xff]
        %v522 = vld [vmem:[%s180 + $0x988] sm:$0xff]
        %v523 = vld [vmem:[%s180 + $0x990] sm:$0xff]
        %v524 = vld [vmem:[%s180 + $0x998] sm:$0xff]
        %v525 = vld [vmem:[%s180 + $0x9a0] sm:$0xff]
        %v526 = vld [vmem:[%s180 + $0x9a8] sm:$0xff]
        %v527 = vld [vmem:[%s180 + $0x9b0] sm:$0xff]
        %v528 = vld [vmem:[%s180 + $0x9b8] sm:$0xff]
        %v529 = vld [vmem:[%s180 + $0x9c0] sm:$0xff]
        %v530 = vld [vmem:[%s180 + $0x9c8] sm:$0xff]
        %v531 = vld [vmem:[%s180 + $0x9d0] sm:$0xff]
        %v532 = vld [vmem:[%s180 + $0x9d8] sm:$0xff]
        %v533 = vld [vmem:[%s180 + $0x9e0] sm:$0xff]
        %v534 = vld [vmem:[%s180 + $0x9e8] sm:$0xff]
        %v535 = vld [vmem:[%s180 + $0x9f0] sm:$0xff]
        %v536 = vld [vmem:[%s180 + $0x9f8] sm:$0xff]
        %v537 = vld [vmem:[%s1] sm:$0xff]
        %v538 = vld [vmem:[%s1 + $0x8] sm:$0xff]
        %v539 = vld [vmem:[%s1 + $0x10] sm:$0xff]
        %v540 = vld [vmem:[%s1 + $0x18] sm:$0xff]
        %v541 = vld [vmem:[%s1 + $0x20] sm:$0xff]
        %v542 = vld [vmem:[%s1 + $0x28] sm:$0xff]
        %v543 = vld [vmem:[%s1 + $0x30] sm:$0xff]
        %v544 = vld [vmem:[%s1 + $0x38] sm:$0xff]
        %v545 = vld [vmem:[%s1 + $0x40] sm:$0xff]
        %v546 = vld [vmem:[%s1 + $0x48] sm:$0xff]
        %v547 = vld [vmem:[%s1 + $0x50] sm:$0xff]
        %v548 = vld [vmem:[%s1 + $0x58] sm:$0xff]
        %v549 = vld [vmem:[%s1 + $0x60] sm:$0xff]
        %v550 = vld [vmem:[%s1 + $0x68] sm:$0xff]
        %v551 = vld [vmem:[%s1 + $0x70] sm:$0xff]
        %v552 = vld [vmem:[%s1 + $0x78] sm:$0xff]
        %v553 = vld [vmem:[%s1 + $0x80] sm:$0xff]
        %v554 = vld [vmem:[%s1 + $0x88] sm:$0xff]
        %v555 = vld [vmem:[%s1 + $0x90] sm:$0xff]
        %v556 = vld [vmem:[%s1 + $0x98] sm:$0xff]
        %v557 = vld [vmem:[%s1 + $0xa0] sm:$0xff]
        %v558 = vld [vmem:[%s1 + $0xa8] sm:$0xff]
        %v559 = vld [vmem:[%s1 + $0xb0] sm:$0xff]
        %v560 = vld [vmem:[%s1 + $0xb8] sm:$0xff]
        %v561 = vld [vmem:[%s1 + $0xc0] sm:$0xff]
        %v562 = vld [vmem:[%s1 + $0xc8] sm:$0xff]
        %v563 = vld [vmem:[%s1 + $0xd0] sm:$0xff]
        %v564 = vld [vmem:[%s1 + $0xd8] sm:$0xff]
        %v565 = vld [vmem:[%s1 + $0xe0] sm:$0xff]
        %v566 = vld [vmem:[%s1 + $0xe8] sm:$0xff]
        %v567 = vld [vmem:[%s1 + $0xf0] sm:$0xff]
        %v568 = vld [vmem:[%s1 + $0xf8] sm:$0xff]
        %v569 = vld [vmem:[%s1 + $0x100] sm:$0xff]
        %v570 = vld [vmem:[%s1 + $0x108] sm:$0xff]
        %v571 = vld [vmem:[%s1 + $0x110] sm:$0xff]
        %v572 = vld [vmem:[%s1 + $0x118] sm:$0xff]
        %v573 = vld [vmem:[%s1 + $0x120] sm:$0xff]
        %v574 = vld [vmem:[%s1 + $0x128] sm:$0xff]
        %v575 = vld [vmem:[%s1 + $0x130] sm:$0xff]
        %v576 = vld [vmem:[%s1 + $0x138] sm:$0xff]
        %v577 = vld [vmem:[%s1 + $0x140] sm:$0xff]
        %v578 = vld [vmem:[%s1 + $0x148] sm:$0xff]
        %v579 = vld [vmem:[%s1 + $0x150] sm:$0xff]
        %v580 = vld [vmem:[%s1 + $0x158] sm:$0xff]
        %v581 = vld [vmem:[%s1 + $0x160] sm:$0xff]
        %v582 = vld [vmem:[%s1 + $0x168] sm:$0xff]
        %v583 = vld [vmem:[%s1 + $0x170] sm:$0xff]
        %v584 = vld [vmem:[%s1 + $0x178] sm:$0xff]
        %v585 = vld [vmem:[%s1 + $0x180] sm:$0xff]
        %v586 = vld [vmem:[%s1 + $0x188] sm:$0xff]
        %v587 = vld [vmem:[%s1 + $0x190] sm:$0xff]
        %v588 = vld [vmem:[%s1 + $0x198] sm:$0xff]
        %v589 = vld [vmem:[%s1 + $0x1a0] sm:$0xff]
        %v590 = vld [vmem:[%s1 + $0x1a8] sm:$0xff]
        %v591 = vld [vmem:[%s1 + $0x1b0] sm:$0xff]
        %v592 = vld [vmem:[%s1 + $0x1b8] sm:$0xff]
        %v593 = vld [vmem:[%s1 + $0x1c0] sm:$0xff]
        %v594 = vld [vmem:[%s1 + $0x1c8] sm:$0xff]
        %v595 = vld [vmem:[%s1 + $0x1d0] sm:$0xff]
        %v596 = vld [vmem:[%s1 + $0x1d8] sm:$0xff]
        %v597 = vld [vmem:[%s1 + $0x1e0] sm:$0xff]
        %v598 = vld [vmem:[%s1 + $0x1e8] sm:$0xff]
        %v599 = vld [vmem:[%s1 + $0x1f0] sm:$0xff]
        %v600 = vld [vmem:[%s1 + $0x1f8] sm:$0xff]
        %v601 = vld [vmem:[%s1 + $0x200] sm:$0xff]
        %v602 = vld [vmem:[%s1 + $0x208] sm:$0xff]
        %v603 = vld [vmem:[%s1 + $0x210] sm:$0xff]
        %v604 = vld [vmem:[%s1 + $0x218] sm:$0xff]
        %v605 = vld [vmem:[%s1 + $0x220] sm:$0xff]
        %v606 = vld [vmem:[%s1 + $0x228] sm:$0xff]
        %v607 = vld [vmem:[%s1 + $0x230] sm:$0xff]
        %v608 = vld [vmem:[%s1 + $0x238] sm:$0xff]
        %v609 = vld [vmem:[%s1 + $0x240] sm:$0xff]
        %v610 = vld [vmem:[%s1 + $0x248] sm:$0xff]
        %v611 = vld [vmem:[%s1 + $0x250] sm:$0xff]
        %v612 = vld [vmem:[%s1 + $0x258] sm:$0xff]
        %v613 = vld [vmem:[%s1 + $0x260] sm:$0xff]
        %v614 = vld [vmem:[%s1 + $0x268] sm:$0xff]
        %v615 = vld [vmem:[%s1 + $0x270] sm:$0xff]
        %v616 = vld [vmem:[%s1 + $0x278] sm:$0xff]
        %v617 = vld [vmem:[%s1 + $0x280] sm:$0xff]
        %v618 = vld [vmem:[%s1 + $0x288] sm:$0xff]
        %v619 = vld [vmem:[%s1 + $0x290] sm:$0xff]
        %v620 = vld [vmem:[%s1 + $0x298] sm:$0xff]
        %v621 = vld [vmem:[%s1 + $0x2a0] sm:$0xff]
        %v622 = vld [vmem:[%s1 + $0x2a8] sm:$0xff]
        %v623 = vld [vmem:[%s1 + $0x2b0] sm:$0xff]
        %v624 = vld [vmem:[%s1 + $0x2b8] sm:$0xff]
        %v625 = vld [vmem:[%s1 + $0x2c0] sm:$0xff]
        %v626 = vld [vmem:[%s1 + $0x2c8] sm:$0xff]
        %v627 = vld [vmem:[%s1 + $0x2d0] sm:$0xff]
        %v628 = vld [vmem:[%s1 + $0x2d8] sm:$0xff]
        %v629 = vld [vmem:[%s1 + $0x2e0] sm:$0xff]
        %v630 = vld [vmem:[%s1 + $0x2e8] sm:$0xff]
        %v631 = vld [vmem:[%s1 + $0x2f0] sm:$0xff]
        %v632 = vld [vmem:[%s1 + $0x2f8] sm:$0xff]
        %v633 = vld [vmem:[%s1 + $0x300] sm:$0xff]
        %v634 = vld [vmem:[%s1 + $0x308] sm:$0xff]
        %v635 = vld [vmem:[%s1 + $0x310] sm:$0xff]
        %v636 = vld [vmem:[%s1 + $0x318] sm:$0xff]
        %v637 = vld [vmem:[%s1 + $0x320] sm:$0xff]
        %v638 = vld [vmem:[%s1 + $0x328] sm:$0xff]
        %v639 = vld [vmem:[%s1 + $0x330] sm:$0xff]
        %v640 = vld [vmem:[%s1 + $0x338] sm:$0xff]
        %v641 = vld [vmem:[%s1 + $0x340] sm:$0xff]
        %v642 = vld [vmem:[%s1 + $0x348] sm:$0xff]
        %v643 = vld [vmem:[%s1 + $0x350] sm:$0xff]
        %v644 = vld [vmem:[%s1 + $0x358] sm:$0xff]
        %v645 = vld [vmem:[%s1 + $0x360] sm:$0xff]
        %v646 = vld [vmem:[%s1 + $0x368] sm:$0xff]
        %v647 = vld [vmem:[%s1 + $0x370] sm:$0xff]
        %v648 = vld [vmem:[%s1 + $0x378] sm:$0xff]
        %v649 = vld [vmem:[%s1 + $0x380] sm:$0xff]
        %v650 = vld [vmem:[%s1 + $0x388] sm:$0xff]
        %v651 = vld [vmem:[%s1 + $0x390] sm:$0xff]
        %v652 = vld [vmem:[%s1 + $0x398] sm:$0xff]
        %v653 = vld [vmem:[%s1 + $0x3a0] sm:$0xff]
        %v654 = vld [vmem:[%s1 + $0x3a8] sm:$0xff]
        %v655 = vld [vmem:[%s1 + $0x3b0] sm:$0xff]
        %v656 = vld [vmem:[%s1 + $0x3b8] sm:$0xff]
        %v657 = vld [vmem:[%s1 + $0x3c0] sm:$0xff]
        %v658 = vld [vmem:[%s1 + $0x3c8] sm:$0xff]
        %v659 = vld [vmem:[%s1 + $0x3d0] sm:$0xff]
        %v660 = vld [vmem:[%s1 + $0x3d8] sm:$0xff]
        %v661 = vld [vmem:[%s1 + $0x3e0] sm:$0xff]
        %v662 = vld [vmem:[%s1 + $0x3e8] sm:$0xff]
        %v663 = vld [vmem:[%s1 + $0x3f0] sm:$0xff]
        %v664 = vld [vmem:[%s1 + $0x3f8] sm:$0xff]
        %v665 = vld [vmem:[#allocation4] sm:$0x1]
        %v667 = vlaneseq
        %v668 = vshrl.u32 %v667, 7
        %v669 = vsub.s32 0, %v668
        %v670 = vrot.slane %v665, %v669
        %672 = vmatprep.subr.mxu0 0.0
        %673 = vmatpush1.msra.mxu0 %v552
        %674 = vmatprep.subr.mxu0 0.0
        %675 = vmatpush1.msra.mxu0 %v551
        %676 = vmatprep.subr.mxu0 0.0
        %677 = vmatpush1.msra.mxu0 %v550
        %678 = vmatprep.subr.mxu0 0.0
        %679 = vmatpush1.msra.mxu0 %v549
        %680 = vmatprep.subr.mxu0 0.0
        %681 = vmatpush1.msra.mxu0 %v548
        %682 = vmatprep.subr.mxu0 0.0
        %683 = vmatpush1.msra.mxu0 %v547
        %684 = vmatprep.subr.mxu0 0.0
        %685 = vmatpush1.msra.mxu0 %v546
        %686 = vmatprep.subr.mxu0 0.0
        %687 = vmatpush1.msra.mxu0 %v545
        %688 = vmatprep.subr.mxu0 0.0
        %689 = vmatpush1.msra.mxu0 %v544
        %690 = vmatprep.subr.mxu0 0.0
        %691 = vmatpush1.msra.mxu0 %v543
        %692 = vmatprep.subr.mxu0 0.0
        %693 = vmatpush1.msra.mxu0 %v542
        %694 = vmatprep.subr.mxu0 0.0
        %695 = vmatpush1.msra.mxu0 %v541
        %696 = vmatprep.subr.mxu0 0.0
        %697 = vmatpush1.msra.mxu0 %v540
        %698 = vmatprep.subr.mxu0 0.0
        %699 = vmatpush1.msra.mxu0 %v539
        %700 = vmatprep.subr.mxu0 0.0
        %701 = vmatpush1.msra.mxu0 %v538
        %702 = vmatprep.subr.mxu0 0.0
        %703 = vmatpush1.msra.mxu0 %v537
        %704 = vmatprep.subr.mxu0 0.0
        %705 = vmatpush2.msra.mxu0 %v568
        %706 = vmatprep.subr.mxu0 0.0
        %707 = vmatpush2.msra.mxu0 %v567
        %708 = vmatprep.subr.mxu0 0.0
        %709 = vmatpush2.msra.mxu0 %v566
        %710 = vmatprep.subr.mxu0 0.0
        %711 = vmatpush2.msra.mxu0 %v565
        %712 = vmatprep.subr.mxu0 0.0
        %713 = vmatpush2.msra.mxu0 %v564
        %714 = vmatprep.subr.mxu0 0.0
        %715 = vmatpush2.msra.mxu0 %v563
        %716 = vmatprep.subr.mxu0 0.0
        %717 = vmatpush2.msra.mxu0 %v562
        %718 = vmatprep.subr.mxu0 0.0
        %719 = vmatpush2.msra.mxu0 %v561
        %720 = vmatprep.subr.mxu0 0.0
        %721 = vmatpush2.msra.mxu0 %v560
        %722 = vmatprep.subr.mxu0 0.0
        %723 = vmatpush2.msra.mxu0 %v559
        %724 = vmatprep.subr.mxu0 0.0
        %725 = vmatpush2.msra.mxu0 %v558
        %726 = vmatprep.subr.mxu0 0.0
        %727 = vmatpush2.msra.mxu0 %v557
        %728 = vmatprep.subr.mxu0 0.0
        %729 = vmatpush2.msra.mxu0 %v556
        %730 = vmatprep.subr.mxu0 0.0
        %731 = vmatpush2.msra.mxu0 %v555
        %732 = vmatprep.subr.mxu0 0.0
        %733 = vmatpush2.msra.mxu0 %v554
        %734 = vmatprep.subr.mxu0 0.0
        %735 = vmatpush2.msra.mxu0 %v553
        %736 = vmatprep.mubr.f32.mxu0 %v218
        %737 = vmatmul.mubr.f32.gmra.mxu0 %v217
        %v738 = vpop.f32.mrf.mxu0
        %v739 = vadd.f32 %v670, %v738
        %v740 = vpop.f32.mrf.mxu0
        %741 = vmatprep.mubr.f32.mxu0 %v226
        %742 = vmatmul.mubr.f32.gmra.mxu0 %v225
        %v743 = vpop.f32.mrf.mxu0
        %v744 = vadd.f32 %v670, %v743
        %v745 = vpop.f32.mrf.mxu0
        %746 = vmatprep.mubr.f32.mxu0 %v234
        %747 = vmatmul.mubr.f32.gmra.mxu0 %v233
        %v748 = vpop.f32.mrf.mxu0
        %v749 = vadd.f32 %v670, %v748
        %v750 = vpop.f32.mrf.mxu0
        %751 = vmatprep.mubr.f32.mxu0 %v242
        %752 = vmatmul.mubr.f32.gmra.mxu0 %v241
        %v753 = vpop.f32.mrf.mxu0
        %v754 = vadd.f32 %v670, %v753
        %v755 = vpop.f32.mrf.mxu0
        %756 = vmatprep.mubr.f32.mxu0 %v250
        %757 = vmatmul.mubr.f32.gmra.mxu0 %v249
        %v758 = vpop.f32.mrf.mxu0
        %v759 = vadd.f32 %v670, %v758
        %v760 = vpop.f32.mrf.mxu0
        %761 = vmatprep.mubr.f32.mxu0 %v258
        %762 = vmatmul.mubr.f32.gmra.mxu0 %v257
        %v763 = vpop.f32.mrf.mxu0
        %v764 = vadd.f32 %v670, %v763
        %v765 = vpop.f32.mrf.mxu0
        %766 = vmatprep.mubr.f32.mxu0 %v266
        %767 = vmatmul.mubr.f32.gmra.mxu0 %v265
        %v768 = vpop.f32.mrf.mxu0
        %v769 = vadd.f32 %v670, %v768
        %v770 = vpop.f32.mrf.mxu0
        %771 = vmatprep.mubr.f32.mxu0 %v274
        %772 = vmatmul.mubr.f32.gmra.mxu0 %v273
        %v773 = vpop.f32.mrf.mxu0
        %v774 = vadd.f32 %v670, %v773
        %v775 = vpop.f32.mrf.mxu0
        %776 = vmatprep.mubr.f32.mxu0 %v282
        %777 = vmatmul.mubr.f32.gmra.mxu0 %v281
        %v778 = vpop.f32.mrf.mxu0
        %v779 = vadd.f32 %v670, %v778
        %v780 = vpop.f32.mrf.mxu0
        %781 = vmatprep.mubr.f32.mxu0 %v290
        %782 = vmatmul.mubr.f32.gmra.mxu0 %v289
        %v783 = vpop.f32.mrf.mxu0
        %v784 = vadd.f32 %v670, %v783
        %v785 = vpop.f32.mrf.mxu0
        %786 = vmatprep.mubr.f32.mxu0 %v298
        %787 = vmatmul.mubr.f32.gmra.mxu0 %v297
        %v788 = vpop.f32.mrf.mxu0
        %v789 = vadd.f32 %v670, %v788
        %v790 = vpop.f32.mrf.mxu0
        %791 = vmatprep.mubr.f32.mxu0 %v306
        %792 = vmatmul.mubr.f32.gmra.mxu0 %v305
        %v793 = vpop.f32.mrf.mxu0
        %v794 = vadd.f32 %v670, %v793
        %v795 = vpop.f32.mrf.mxu0
        %796 = vmatprep.mubr.f32.mxu0 %v314
        %797 = vmatmul.mubr.f32.gmra.mxu0 %v313
        %v798 = vpop.f32.mrf.mxu0
        %v799 = vadd.f32 %v670, %v798
        %v800 = vpop.f32.mrf.mxu0
        %801 = vmatprep.mubr.f32.mxu0 %v322
        %802 = vmatmul.mubr.f32.gmra.mxu0 %v321
        %v803 = vpop.f32.mrf.mxu0
        %v804 = vadd.f32 %v670, %v803
        %v805 = vpop.f32.mrf.mxu0
        %806 = vmatprep.mubr.f32.mxu0 %v330
        %807 = vmatmul.mubr.f32.gmra.mxu0 %v329
        %v808 = vpop.f32.mrf.mxu0
        %v809 = vadd.f32 %v670, %v808
        %v810 = vpop.f32.mrf.mxu0
        %811 = vmatprep.mubr.f32.mxu0 %v338
        %812 = vmatmul.mubr.f32.gmra.mxu0 %v337
        %v813 = vpop.f32.mrf.mxu0
        %v814 = vadd.f32 %v670, %v813
        %v815 = vpop.f32.mrf.mxu0
        %816 = vmatprep.mubr.f32.mxu0 %v346
        %817 = vmatmul.mubr.f32.gmra.mxu0 %v345
        %v818 = vpop.f32.mrf.mxu0
        %v819 = vadd.f32 %v670, %v818
        %v820 = vpop.f32.mrf.mxu0
        %821 = vmatprep.mubr.f32.mxu0 %v354
        %822 = vmatmul.mubr.f32.gmra.mxu0 %v353
        %v823 = vpop.f32.mrf.mxu0
        %v824 = vadd.f32 %v670, %v823
        %v825 = vpop.f32.mrf.mxu0
        %826 = vmatprep.mubr.f32.mxu0 %v362
        %827 = vmatmul.mubr.f32.gmra.mxu0 %v361
        %v828 = vpop.f32.mrf.mxu0
        %v829 = vadd.f32 %v670, %v828
        %v830 = vpop.f32.mrf.mxu0
        %831 = vmatprep.mubr.f32.mxu0 %v370
        %832 = vmatmul.mubr.f32.gmra.mxu0 %v369
        %v833 = vpop.f32.mrf.mxu0
        %v834 = vadd.f32 %v670, %v833
        %v835 = vpop.f32.mrf.mxu0
        %836 = vmatprep.mubr.f32.mxu0 %v378
        %837 = vmatmul.mubr.f32.gmra.mxu0 %v377
        %v838 = vpop.f32.mrf.mxu0
        %v839 = vadd.f32 %v670, %v838
        %v840 = vpop.f32.mrf.mxu0
        %841 = vmatprep.mubr.f32.mxu0 %v386
        %842 = vmatmul.mubr.f32.gmra.mxu0 %v385
        %v843 = vpop.f32.mrf.mxu0
        %v844 = vadd.f32 %v670, %v843
        %v845 = vpop.f32.mrf.mxu0
        %846 = vmatprep.mubr.f32.mxu0 %v394
        %847 = vmatmul.mubr.f32.gmra.mxu0 %v393
        %v848 = vpop.f32.mrf.mxu0
        %v849 = vadd.f32 %v670, %v848
        %v850 = vpop.f32.mrf.mxu0
        %851 = vmatprep.mubr.f32.mxu0 %v402
        %852 = vmatmul.mubr.f32.gmra.mxu0 %v401
        %v853 = vpop.f32.mrf.mxu0
        %v854 = vadd.f32 %v670, %v853
        %v855 = vpop.f32.mrf.mxu0
        %856 = vmatprep.mubr.f32.mxu0 %v410
        %857 = vmatmul.mubr.f32.gmra.mxu0 %v409
        %v858 = vpop.f32.mrf.mxu0
        %v859 = vadd.f32 %v670, %v858
        %v860 = vpop.f32.mrf.mxu0
        %861 = vmatprep.mubr.f32.mxu0 %v418
        %862 = vmatmul.mubr.f32.gmra.mxu0 %v417
        %v863 = vpop.f32.mrf.mxu0
        %v864 = vadd.f32 %v670, %v863
        %v865 = vpop.f32.mrf.mxu0
        %866 = vmatprep.mubr.f32.mxu0 %v426
        %867 = vmatmul.mubr.f32.gmra.mxu0 %v425
        %v868 = vpop.f32.mrf.mxu0
        %v869 = vadd.f32 %v670, %v868
        %v870 = vpop.f32.mrf.mxu0
        %871 = vmatprep.mubr.f32.mxu0 %v434
        %872 = vmatmul.mubr.f32.gmra.mxu0 %v433
        %v873 = vpop.f32.mrf.mxu0
        %v874 = vadd.f32 %v670, %v873
        %v875 = vpop.f32.mrf.mxu0
        %876 = vmatprep.mubr.f32.mxu0 %v442
        %877 = vmatmul.mubr.f32.gmra.mxu0 %v441
        %v878 = vpop.f32.mrf.mxu0
        %v879 = vadd.f32 %v670, %v878
        %v880 = vpop.f32.mrf.mxu0
        %881 = vmatprep.mubr.f32.mxu0 %v450
        %882 = vmatmul.mubr.f32.gmra.mxu0 %v449
        %v883 = vpop.f32.mrf.mxu0
        %v884 = vadd.f32 %v670, %v883
        %v885 = vpop.f32.mrf.mxu0
        %886 = vmatprep.mubr.f32.mxu0 %v458
        %887 = vmatmul.mubr.f32.gmra.mxu0 %v457
        %v888 = vpop.f32.mrf.mxu0
        %v889 = vadd.f32 %v670, %v888
        %v890 = vpop.f32.mrf.mxu0
        %891 = vmatprep.mubr.f32.mxu0 %v466
        %892 = vmatmul.mubr.f32.gmra.mxu0 %v465
        %v893 = vpop.f32.mrf.mxu0
        %v894 = vadd.f32 %v670, %v893
        %v895 = vpop.f32.mrf.mxu0
        %896 = vmatprep.mubr.f32.mxu0 %v474
        %897 = vmatmul.mubr.f32.gmra.mxu0 %v473
        %v898 = vpop.f32.mrf.mxu0
        %v899 = vadd.f32 %v670, %v898
        %v900 = vpop.f32.mrf.mxu0
        %901 = vmatprep.mubr.f32.mxu0 %v482
        %902 = vmatmul.mubr.f32.gmra.mxu0 %v481
        %v903 = vpop.f32.mrf.mxu0
        %v904 = vadd.f32 %v670, %v903
        %v905 = vpop.f32.mrf.mxu0
        %906 = vmatprep.mubr.f32.mxu0 %v490
        %907 = vmatmul.mubr.f32.gmra.mxu0 %v489
        %v908 = vpop.f32.mrf.mxu0
        %v909 = vadd.f32 %v670, %v908
        %v910 = vpop.f32.mrf.mxu0
        %911 = vmatprep.mubr.f32.mxu0 %v498
        %912 = vmatmul.mubr.f32.gmra.mxu0 %v497
        %v913 = vpop.f32.mrf.mxu0
        %v914 = vadd.f32 %v670, %v913
        %v915 = vpop.f32.mrf.mxu0
        %916 = vmatprep.mubr.f32.mxu0 %v506
        %917 = vmatmul.mubr.f32.gmra.mxu0 %v505
        %v918 = vpop.f32.mrf.mxu0
        %v919 = vadd.f32 %v670, %v918
        %v920 = vpop.f32.mrf.mxu0
        %921 = vmatprep.mubr.f32.mxu0 %v514
        %922 = vmatmul.mubr.f32.gmra.mxu0 %v513
        %v923 = vpop.f32.mrf.mxu0
        %v924 = vadd.f32 %v670, %v923
        %v925 = vpop.f32.mrf.mxu0
        %926 = vmatprep.mubr.f32.mxu0 %v522
        %927 = vmatmul.mubr.f32.gmra.mxu0 %v521
        %v928 = vpop.f32.mrf.mxu0
        %v929 = vadd.f32 %v670, %v928
        %v930 = vpop.f32.mrf.mxu0
        %931 = vmatprep.mubr.f32.mxu0 %v530
        %932 = vmatmul.mubr.f32.gmra.mxu0 %v529
        %v933 = vpop.f32.mrf.mxu0
        %v934 = vadd.f32 %v670, %v933
        %v935 = vpop.f32.mrf.mxu0
        %936 = vdwg.mxu0
        %937 = vmatprep.subr.mxu0 0.0
        %938 = vmatpush1.msra.mxu0 %v584
        %939 = vmatprep.subr.mxu0 0.0
        %940 = vmatpush1.msra.mxu0 %v583
        %941 = vmatprep.subr.mxu0 0.0
        %942 = vmatpush1.msra.mxu0 %v582
        %943 = vmatprep.subr.mxu0 0.0
        %944 = vmatpush1.msra.mxu0 %v581
        %945 = vmatprep.subr.mxu0 0.0
        %946 = vmatpush1.msra.mxu0 %v580
        %947 = vmatprep.subr.mxu0 0.0
        %948 = vmatpush1.msra.mxu0 %v579
        %949 = vmatprep.subr.mxu0 0.0
        %950 = vmatpush1.msra.mxu0 %v578
        %951 = vmatprep.subr.mxu0 0.0
        %952 = vmatpush1.msra.mxu0 %v577
        %953 = vmatprep.subr.mxu0 0.0
        %954 = vmatpush1.msra.mxu0 %v576
        %955 = vmatprep.subr.mxu0 0.0
        %956 = vmatpush1.msra.mxu0 %v575
        %957 = vmatprep.subr.mxu0 0.0
        %958 = vmatpush1.msra.mxu0 %v574
        %959 = vmatprep.subr.mxu0 0.0
        %960 = vmatpush1.msra.mxu0 %v573
        %961 = vmatprep.subr.mxu0 0.0
        %962 = vmatpush1.msra.mxu0 %v572
        %963 = vmatprep.subr.mxu0 0.0
        %964 = vmatpush1.msra.mxu0 %v571
        %965 = vmatprep.subr.mxu0 0.0
        %966 = vmatpush1.msra.mxu0 %v570
        %967 = vmatprep.subr.mxu0 0.0
        %968 = vmatpush1.msra.mxu0 %v569
        %969 = vmatprep.subr.mxu0 0.0
        %970 = vmatpush2.msra.mxu0 %v600
        %971 = vmatprep.subr.mxu0 0.0
        %972 = vmatpush2.msra.mxu0 %v599
        %973 = vmatprep.subr.mxu0 0.0
        %974 = vmatpush2.msra.mxu0 %v598
        %975 = vmatprep.subr.mxu0 0.0
        %976 = vmatpush2.msra.mxu0 %v597
        %977 = vmatprep.subr.mxu0 0.0
        %978 = vmatpush2.msra.mxu0 %v596
        %979 = vmatprep.subr.mxu0 0.0
        %980 = vmatpush2.msra.mxu0 %v595
        %981 = vmatprep.subr.mxu0 0.0
        %982 = vmatpush2.msra.mxu0 %v594
        %983 = vmatprep.subr.mxu0 0.0
        %984 = vmatpush2.msra.mxu0 %v593
        %985 = vmatprep.subr.mxu0 0.0
        %986 = vmatpush2.msra.mxu0 %v592
        %987 = vmatprep.subr.mxu0 0.0
        %988 = vmatpush2.msra.mxu0 %v591
        %989 = vmatprep.subr.mxu0 0.0
        %990 = vmatpush2.msra.mxu0 %v590
        %991 = vmatprep.subr.mxu0 0.0
        %992 = vmatpush2.msra.mxu0 %v589
        %993 = vmatprep.subr.mxu0 0.0
        %994 = vmatpush2.msra.mxu0 %v588
        %995 = vmatprep.subr.mxu0 0.0
        %996 = vmatpush2.msra.mxu0 %v587
        %997 = vmatprep.subr.mxu0 0.0
        %998 = vmatpush2.msra.mxu0 %v586
        %999 = vmatprep.subr.mxu0 0.0
        %1000 = vmatpush2.msra.mxu0 %v585
        %1001 = vmatprep.mubr.f32.mxu0 %v220
        %1002 = vmatmul.mubr.f32.gmra.mxu0 %v219
        %v1003 = vpop.f32.mrf.mxu0
        %v1004 = vadd.f32 %v739, %v1003
        %v1005 = vpop.f32.mrf.mxu0
        %1006 = vmatprep.mubr.f32.mxu0 %v228
        %1007 = vmatmul.mubr.f32.gmra.mxu0 %v227
        %v1008 = vpop.f32.mrf.mxu0
        %v1009 = vadd.f32 %v744, %v1008
        %v1010 = vpop.f32.mrf.mxu0
        %1011 = vmatprep.mubr.f32.mxu0 %v236
        %1012 = vmatmul.mubr.f32.gmra.mxu0 %v235
        %v1013 = vpop.f32.mrf.mxu0
        %v1014 = vadd.f32 %v749, %v1013
        %v1015 = vpop.f32.mrf.mxu0
        %1016 = vmatprep.mubr.f32.mxu0 %v244
        %1017 = vmatmul.mubr.f32.gmra.mxu0 %v243
        %v1018 = vpop.f32.mrf.mxu0
        %v1019 = vadd.f32 %v754, %v1018
        %v1020 = vpop.f32.mrf.mxu0
        %1021 = vmatprep.mubr.f32.mxu0 %v252
        %1022 = vmatmul.mubr.f32.gmra.mxu0 %v251
        %v1023 = vpop.f32.mrf.mxu0
        %v1024 = vadd.f32 %v759, %v1023
        %v1025 = vpop.f32.mrf.mxu0
        %1026 = vmatprep.mubr.f32.mxu0 %v260
        %1027 = vmatmul.mubr.f32.gmra.mxu0 %v259
        %v1028 = vpop.f32.mrf.mxu0
        %v1029 = vadd.f32 %v764, %v1028
        %v1030 = vpop.f32.mrf.mxu0
        %1031 = vmatprep.mubr.f32.mxu0 %v268
        %1032 = vmatmul.mubr.f32.gmra.mxu0 %v267
        %v1033 = vpop.f32.mrf.mxu0
        %v1034 = vadd.f32 %v769, %v1033
        %v1035 = vpop.f32.mrf.mxu0
        %1036 = vmatprep.mubr.f32.mxu0 %v276
        %1037 = vmatmul.mubr.f32.gmra.mxu0 %v275
        %v1038 = vpop.f32.mrf.mxu0
        %v1039 = vadd.f32 %v774, %v1038
        %v1040 = vpop.f32.mrf.mxu0
        %1041 = vmatprep.mubr.f32.mxu0 %v284
        %1042 = vmatmul.mubr.f32.gmra.mxu0 %v283
        %v1043 = vpop.f32.mrf.mxu0
        %v1044 = vadd.f32 %v779, %v1043
        %v1045 = vpop.f32.mrf.mxu0
        %1046 = vmatprep.mubr.f32.mxu0 %v292
        %1047 = vmatmul.mubr.f32.gmra.mxu0 %v291
        %v1048 = vpop.f32.mrf.mxu0
        %v1049 = vadd.f32 %v784, %v1048
        %v1050 = vpop.f32.mrf.mxu0
        %1051 = vmatprep.mubr.f32.mxu0 %v300
        %1052 = vmatmul.mubr.f32.gmra.mxu0 %v299
        %v1053 = vpop.f32.mrf.mxu0
        %v1054 = vadd.f32 %v789, %v1053
        %v1055 = vpop.f32.mrf.mxu0
        %1056 = vmatprep.mubr.f32.mxu0 %v308
        %1057 = vmatmul.mubr.f32.gmra.mxu0 %v307
        %v1058 = vpop.f32.mrf.mxu0
        %v1059 = vadd.f32 %v794, %v1058
        %v1060 = vpop.f32.mrf.mxu0
        %1061 = vmatprep.mubr.f32.mxu0 %v316
        %1062 = vmatmul.mubr.f32.gmra.mxu0 %v315
        %v1063 = vpop.f32.mrf.mxu0
        %v1064 = vadd.f32 %v799, %v1063
        %v1065 = vpop.f32.mrf.mxu0
        %1066 = vmatprep.mubr.f32.mxu0 %v324
        %1067 = vmatmul.mubr.f32.gmra.mxu0 %v323
        %v1068 = vpop.f32.mrf.mxu0
        %v1069 = vadd.f32 %v804, %v1068
        %v1070 = vpop.f32.mrf.mxu0
        %1071 = vmatprep.mubr.f32.mxu0 %v332
        %1072 = vmatmul.mubr.f32.gmra.mxu0 %v331
        %v1073 = vpop.f32.mrf.mxu0
        %v1074 = vadd.f32 %v809, %v1073
        %v1075 = vpop.f32.mrf.mxu0
        %1076 = vmatprep.mubr.f32.mxu0 %v340
        %1077 = vmatmul.mubr.f32.gmra.mxu0 %v339
        %v1078 = vpop.f32.mrf.mxu0
        %v1079 = vadd.f32 %v814, %v1078
        %v1080 = vpop.f32.mrf.mxu0
        %1081 = vmatprep.mubr.f32.mxu0 %v348
        %1082 = vmatmul.mubr.f32.gmra.mxu0 %v347
        %v1083 = vpop.f32.mrf.mxu0
        %v1084 = vadd.f32 %v819, %v1083
        %v1085 = vpop.f32.mrf.mxu0
        %1086 = vmatprep.mubr.f32.mxu0 %v356
        %1087 = vmatmul.mubr.f32.gmra.mxu0 %v355
        %v1088 = vpop.f32.mrf.mxu0
        %v1089 = vadd.f32 %v824, %v1088
        %v1090 = vpop.f32.mrf.mxu0
        %1091 = vmatprep.mubr.f32.mxu0 %v364
        %1092 = vmatmul.mubr.f32.gmra.mxu0 %v363
        %v1093 = vpop.f32.mrf.mxu0
        %v1094 = vadd.f32 %v829, %v1093
        %v1095 = vpop.f32.mrf.mxu0
        %1096 = vmatprep.mubr.f32.mxu0 %v372
        %1097 = vmatmul.mubr.f32.gmra.mxu0 %v371
        %v1098 = vpop.f32.mrf.mxu0
        %v1099 = vadd.f32 %v834, %v1098
        %v1100 = vpop.f32.mrf.mxu0
        %1101 = vmatprep.mubr.f32.mxu0 %v380
        %1102 = vmatmul.mubr.f32.gmra.mxu0 %v379
        %v1103 = vpop.f32.mrf.mxu0
        %v1104 = vadd.f32 %v839, %v1103
        %v1105 = vpop.f32.mrf.mxu0
        %1106 = vmatprep.mubr.f32.mxu0 %v388
        %1107 = vmatmul.mubr.f32.gmra.mxu0 %v387
        %v1108 = vpop.f32.mrf.mxu0
        %v1109 = vadd.f32 %v844, %v1108
        %v1110 = vpop.f32.mrf.mxu0
        %1111 = vmatprep.mubr.f32.mxu0 %v396
        %1112 = vmatmul.mubr.f32.gmra.mxu0 %v395
        %v1113 = vpop.f32.mrf.mxu0
        %v1114 = vadd.f32 %v849, %v1113
        %v1115 = vpop.f32.mrf.mxu0
        %1116 = vmatprep.mubr.f32.mxu0 %v404
        %1117 = vmatmul.mubr.f32.gmra.mxu0 %v403
        %v1118 = vpop.f32.mrf.mxu0
        %v1119 = vadd.f32 %v854, %v1118
        %v1120 = vpop.f32.mrf.mxu0
        %1121 = vmatprep.mubr.f32.mxu0 %v412
        %1122 = vmatmul.mubr.f32.gmra.mxu0 %v411
        %v1123 = vpop.f32.mrf.mxu0
        %v1124 = vadd.f32 %v859, %v1123
        %v1125 = vpop.f32.mrf.mxu0
        %1126 = vmatprep.mubr.f32.mxu0 %v420
        %1127 = vmatmul.mubr.f32.gmra.mxu0 %v419
        %v1128 = vpop.f32.mrf.mxu0
        %v1129 = vadd.f32 %v864, %v1128
        %v1130 = vpop.f32.mrf.mxu0
        %1131 = vmatprep.mubr.f32.mxu0 %v428
        %1132 = vmatmul.mubr.f32.gmra.mxu0 %v427
        %v1133 = vpop.f32.mrf.mxu0
        %v1134 = vadd.f32 %v869, %v1133
        %v1135 = vpop.f32.mrf.mxu0
        %1136 = vmatprep.mubr.f32.mxu0 %v436
        %1137 = vmatmul.mubr.f32.gmra.mxu0 %v435
        %v1138 = vpop.f32.mrf.mxu0
        %v1139 = vadd.f32 %v874, %v1138
        %v1140 = vpop.f32.mrf.mxu0
        %1141 = vmatprep.mubr.f32.mxu0 %v444
        %1142 = vmatmul.mubr.f32.gmra.mxu0 %v443
        %v1143 = vpop.f32.mrf.mxu0
        %v1144 = vadd.f32 %v879, %v1143
        %v1145 = vpop.f32.mrf.mxu0
        %1146 = vmatprep.mubr.f32.mxu0 %v452
        %1147 = vmatmul.mubr.f32.gmra.mxu0 %v451
        %v1148 = vpop.f32.mrf.mxu0
        %v1149 = vadd.f32 %v884, %v1148
        %v1150 = vpop.f32.mrf.mxu0
        %1151 = vmatprep.mubr.f32.mxu0 %v460
        %1152 = vmatmul.mubr.f32.gmra.mxu0 %v459
        %v1153 = vpop.f32.mrf.mxu0
        %v1154 = vadd.f32 %v889, %v1153
        %v1155 = vpop.f32.mrf.mxu0
        %1156 = vmatprep.mubr.f32.mxu0 %v468
        %1157 = vmatmul.mubr.f32.gmra.mxu0 %v467
        %v1158 = vpop.f32.mrf.mxu0
        %v1159 = vadd.f32 %v894, %v1158
        %v1160 = vpop.f32.mrf.mxu0
        %1161 = vmatprep.mubr.f32.mxu0 %v476
        %1162 = vmatmul.mubr.f32.gmra.mxu0 %v475
        %v1163 = vpop.f32.mrf.mxu0
        %v1164 = vadd.f32 %v899, %v1163
        %v1165 = vpop.f32.mrf.mxu0
        %1166 = vmatprep.mubr.f32.mxu0 %v484
        %1167 = vmatmul.mubr.f32.gmra.mxu0 %v483
        %v1168 = vpop.f32.mrf.mxu0
        %v1169 = vadd.f32 %v904, %v1168
        %v1170 = vpop.f32.mrf.mxu0
        %1171 = vmatprep.mubr.f32.mxu0 %v492
        %1172 = vmatmul.mubr.f32.gmra.mxu0 %v491
        %v1173 = vpop.f32.mrf.mxu0
        %v1174 = vadd.f32 %v909, %v1173
        %v1175 = vpop.f32.mrf.mxu0
        %1176 = vmatprep.mubr.f32.mxu0 %v500
        %1177 = vmatmul.mubr.f32.gmra.mxu0 %v499
        %v1178 = vpop.f32.mrf.mxu0
        %v1179 = vadd.f32 %v914, %v1178
        %v1180 = vpop.f32.mrf.mxu0
        %1181 = vmatprep.mubr.f32.mxu0 %v508
        %1182 = vmatmul.mubr.f32.gmra.mxu0 %v507
        %v1183 = vpop.f32.mrf.mxu0
        %v1184 = vadd.f32 %v919, %v1183
        %v1185 = vpop.f32.mrf.mxu0
        %1186 = vmatprep.mubr.f32.mxu0 %v516
        %1187 = vmatmul.mubr.f32.gmra.mxu0 %v515
        %v1188 = vpop.f32.mrf.mxu0
        %v1189 = vadd.f32 %v924, %v1188
        %v1190 = vpop.f32.mrf.mxu0
        %1191 = vmatprep.mubr.f32.mxu0 %v524
        %1192 = vmatmul.mubr.f32.gmra.mxu0 %v523
        %v1193 = vpop.f32.mrf.mxu0
        %v1194 = vadd.f32 %v929, %v1193
        %v1195 = vpop.f32.mrf.mxu0
        %1196 = vmatprep.mubr.f32.mxu0 %v532
        %1197 = vmatmul.mubr.f32.gmra.mxu0 %v531
        %v1198 = vpop.f32.mrf.mxu0
        %v1199 = vadd.f32 %v934, %v1198
        %v1200 = vpop.f32.mrf.mxu0
        %1201 = vdwg.mxu0
        %1202 = vmatprep.subr.mxu0 0.0
        %1203 = vmatpush1.msra.mxu0 %v616
        %1204 = vmatprep.subr.mxu0 0.0
        %1205 = vmatpush1.msra.mxu0 %v615
        %1206 = vmatprep.subr.mxu0 0.0
        %1207 = vmatpush1.msra.mxu0 %v614
        %1208 = vmatprep.subr.mxu0 0.0
        %1209 = vmatpush1.msra.mxu0 %v613
        %1210 = vmatprep.subr.mxu0 0.0
        %1211 = vmatpush1.msra.mxu0 %v612
        %1212 = vmatprep.subr.mxu0 0.0
        %1213 = vmatpush1.msra.mxu0 %v611
        %1214 = vmatprep.subr.mxu0 0.0
        %1215 = vmatpush1.msra.mxu0 %v610
        %1216 = vmatprep.subr.mxu0 0.0
        %1217 = vmatpush1.msra.mxu0 %v609
        %1218 = vmatprep.subr.mxu0 0.0
        %1219 = vmatpush1.msra.mxu0 %v608
        %1220 = vmatprep.subr.mxu0 0.0
        %1221 = vmatpush1.msra.mxu0 %v607
        %1222 = vmatprep.subr.mxu0 0.0
        %1223 = vmatpush1.msra.mxu0 %v606
        %1224 = vmatprep.subr.mxu0 0.0
        %1225 = vmatpush1.msra.mxu0 %v605
        %1226 = vmatprep.subr.mxu0 0.0
        %1227 = vmatpush1.msra.mxu0 %v604
        %1228 = vmatprep.subr.mxu0 0.0
        %1229 = vmatpush1.msra.mxu0 %v603
        %1230 = vmatprep.subr.mxu0 0.0
        %1231 = vmatpush1.msra.mxu0 %v602
        %1232 = vmatprep.subr.mxu0 0.0
        %1233 = vmatpush1.msra.mxu0 %v601
        %1234 = vmatprep.subr.mxu0 0.0
        %1235 = vmatpush2.msra.mxu0 %v632
        %1236 = vmatprep.subr.mxu0 0.0
        %1237 = vmatpush2.msra.mxu0 %v631
        %1238 = vmatprep.subr.mxu0 0.0
        %1239 = vmatpush2.msra.mxu0 %v630
        %1240 = vmatprep.subr.mxu0 0.0
        %1241 = vmatpush2.msra.mxu0 %v629
        %1242 = vmatprep.subr.mxu0 0.0
        %1243 = vmatpush2.msra.mxu0 %v628
        %1244 = vmatprep.subr.mxu0 0.0
        %1245 = vmatpush2.msra.mxu0 %v627
        %1246 = vmatprep.subr.mxu0 0.0
        %1247 = vmatpush2.msra.mxu0 %v626
        %1248 = vmatprep.subr.mxu0 0.0
        %1249 = vmatpush2.msra.mxu0 %v625
        %1250 = vmatprep.subr.mxu0 0.0
        %1251 = vmatpush2.msra.mxu0 %v624
        %1252 = vmatprep.subr.mxu0 0.0
        %1253 = vmatpush2.msra.mxu0 %v623
        %1254 = vmatprep.subr.mxu0 0.0
        %1255 = vmatpush2.msra.mxu0 %v622
        %1256 = vmatprep.subr.mxu0 0.0
        %1257 = vmatpush2.msra.mxu0 %v621
        %1258 = vmatprep.subr.mxu0 0.0
        %1259 = vmatpush2.msra.mxu0 %v620
        %1260 = vmatprep.subr.mxu0 0.0
        %1261 = vmatpush2.msra.mxu0 %v619
        %1262 = vmatprep.subr.mxu0 0.0
        %1263 = vmatpush2.msra.mxu0 %v618
        %1264 = vmatprep.subr.mxu0 0.0
        %1265 = vmatpush2.msra.mxu0 %v617
        %1266 = vmatprep.mubr.f32.mxu0 %v222
        %1267 = vmatmul.mubr.f32.gmra.mxu0 %v221
        %v1268 = vpop.f32.mrf.mxu0
        %v1269 = vadd.f32 %v1004, %v1268
        %v1270 = vpop.f32.mrf.mxu0
        %1271 = vmatprep.mubr.f32.mxu0 %v230
        %1272 = vmatmul.mubr.f32.gmra.mxu0 %v229
        %v1273 = vpop.f32.mrf.mxu0
        %v1274 = vadd.f32 %v1009, %v1273
        %v1275 = vpop.f32.mrf.mxu0
        %1276 = vmatprep.mubr.f32.mxu0 %v238
        %1277 = vmatmul.mubr.f32.gmra.mxu0 %v237
        %v1278 = vpop.f32.mrf.mxu0
        %v1279 = vadd.f32 %v1014, %v1278
        %v1280 = vpop.f32.mrf.mxu0
        %1281 = vmatprep.mubr.f32.mxu0 %v246
        %1282 = vmatmul.mubr.f32.gmra.mxu0 %v245
        %v1283 = vpop.f32.mrf.mxu0
        %v1284 = vadd.f32 %v1019, %v1283
        %v1285 = vpop.f32.mrf.mxu0
        %1286 = vmatprep.mubr.f32.mxu0 %v254
        %1287 = vmatmul.mubr.f32.gmra.mxu0 %v253
        %v1288 = vpop.f32.mrf.mxu0
        %v1289 = vadd.f32 %v1024, %v1288
        %v1290 = vpop.f32.mrf.mxu0
        %1291 = vmatprep.mubr.f32.mxu0 %v262
        %1292 = vmatmul.mubr.f32.gmra.mxu0 %v261
        %v1293 = vpop.f32.mrf.mxu0
        %v1294 = vadd.f32 %v1029, %v1293
        %v1295 = vpop.f32.mrf.mxu0
        %1296 = vmatprep.mubr.f32.mxu0 %v270
        %1297 = vmatmul.mubr.f32.gmra.mxu0 %v269
        %v1298 = vpop.f32.mrf.mxu0
        %v1299 = vadd.f32 %v1034, %v1298
        %v1300 = vpop.f32.mrf.mxu0
        %1301 = vmatprep.mubr.f32.mxu0 %v278
        %1302 = vmatmul.mubr.f32.gmra.mxu0 %v277
        %v1303 = vpop.f32.mrf.mxu0
        %v1304 = vadd.f32 %v1039, %v1303
        %v1305 = vpop.f32.mrf.mxu0
        %1306 = vmatprep.mubr.f32.mxu0 %v286
        %1307 = vmatmul.mubr.f32.gmra.mxu0 %v285
        %v1308 = vpop.f32.mrf.mxu0
        %v1309 = vadd.f32 %v1044, %v1308
        %v1310 = vpop.f32.mrf.mxu0
        %1311 = vmatprep.mubr.f32.mxu0 %v294
        %1312 = vmatmul.mubr.f32.gmra.mxu0 %v293
        %v1313 = vpop.f32.mrf.mxu0
        %v1314 = vadd.f32 %v1049, %v1313
        %v1315 = vpop.f32.mrf.mxu0
        %1316 = vmatprep.mubr.f32.mxu0 %v302
        %1317 = vmatmul.mubr.f32.gmra.mxu0 %v301
        %v1318 = vpop.f32.mrf.mxu0
        %v1319 = vadd.f32 %v1054, %v1318
        %v1320 = vpop.f32.mrf.mxu0
        %1321 = vmatprep.mubr.f32.mxu0 %v310
        %1322 = vmatmul.mubr.f32.gmra.mxu0 %v309
        %v1323 = vpop.f32.mrf.mxu0
        %v1324 = vadd.f32 %v1059, %v1323
        %v1325 = vpop.f32.mrf.mxu0
        %1326 = vmatprep.mubr.f32.mxu0 %v318
        %1327 = vmatmul.mubr.f32.gmra.mxu0 %v317
        %v1328 = vpop.f32.mrf.mxu0
        %v1329 = vadd.f32 %v1064, %v1328
        %v1330 = vpop.f32.mrf.mxu0
        %1331 = vmatprep.mubr.f32.mxu0 %v326
        %1332 = vmatmul.mubr.f32.gmra.mxu0 %v325
        %v1333 = vpop.f32.mrf.mxu0
        %v1334 = vadd.f32 %v1069, %v1333
        %v1335 = vpop.f32.mrf.mxu0
        %1336 = vmatprep.mubr.f32.mxu0 %v334
        %1337 = vmatmul.mubr.f32.gmra.mxu0 %v333
        %v1338 = vpop.f32.mrf.mxu0
        %v1339 = vadd.f32 %v1074, %v1338
        %v1340 = vpop.f32.mrf.mxu0
        %1341 = vmatprep.mubr.f32.mxu0 %v342
        %1342 = vmatmul.mubr.f32.gmra.mxu0 %v341
        %v1343 = vpop.f32.mrf.mxu0
        %v1344 = vadd.f32 %v1079, %v1343
        %v1345 = vpop.f32.mrf.mxu0
        %1346 = vmatprep.mubr.f32.mxu0 %v350
        %1347 = vmatmul.mubr.f32.gmra.mxu0 %v349
        %v1348 = vpop.f32.mrf.mxu0
        %v1349 = vadd.f32 %v1084, %v1348
        %v1350 = vpop.f32.mrf.mxu0
        %1351 = vmatprep.mubr.f32.mxu0 %v358
        %1352 = vmatmul.mubr.f32.gmra.mxu0 %v357
        %v1353 = vpop.f32.mrf.mxu0
        %v1354 = vadd.f32 %v1089, %v1353
        %v1355 = vpop.f32.mrf.mxu0
        %1356 = vmatprep.mubr.f32.mxu0 %v366
        %1357 = vmatmul.mubr.f32.gmra.mxu0 %v365
        %v1358 = vpop.f32.mrf.mxu0
        %v1359 = vadd.f32 %v1094, %v1358
        %v1360 = vpop.f32.mrf.mxu0
        %1361 = vmatprep.mubr.f32.mxu0 %v374
        %1362 = vmatmul.mubr.f32.gmra.mxu0 %v373
        %v1363 = vpop.f32.mrf.mxu0
        %v1364 = vadd.f32 %v1099, %v1363
        %v1365 = vpop.f32.mrf.mxu0
        %1366 = vmatprep.mubr.f32.mxu0 %v382
        %1367 = vmatmul.mubr.f32.gmra.mxu0 %v381
        %v1368 = vpop.f32.mrf.mxu0
        %v1369 = vadd.f32 %v1104, %v1368
        %v1370 = vpop.f32.mrf.mxu0
        %1371 = vmatprep.mubr.f32.mxu0 %v390
        %1372 = vmatmul.mubr.f32.gmra.mxu0 %v389
        %v1373 = vpop.f32.mrf.mxu0
        %v1374 = vadd.f32 %v1109, %v1373
        %v1375 = vpop.f32.mrf.mxu0
        %1376 = vmatprep.mubr.f32.mxu0 %v398
        %1377 = vmatmul.mubr.f32.gmra.mxu0 %v397
        %v1378 = vpop.f32.mrf.mxu0
        %v1379 = vadd.f32 %v1114, %v1378
        %v1380 = vpop.f32.mrf.mxu0
        %1381 = vmatprep.mubr.f32.mxu0 %v406
        %1382 = vmatmul.mubr.f32.gmra.mxu0 %v405
        %v1383 = vpop.f32.mrf.mxu0
        %v1384 = vadd.f32 %v1119, %v1383
        %v1385 = vpop.f32.mrf.mxu0
        %1386 = vmatprep.mubr.f32.mxu0 %v414
        %1387 = vmatmul.mubr.f32.gmra.mxu0 %v413
        %v1388 = vpop.f32.mrf.mxu0
        %v1389 = vadd.f32 %v1124, %v1388
        %v1390 = vpop.f32.mrf.mxu0
        %1391 = vmatprep.mubr.f32.mxu0 %v422
        %1392 = vmatmul.mubr.f32.gmra.mxu0 %v421
        %v1393 = vpop.f32.mrf.mxu0
        %v1394 = vadd.f32 %v1129, %v1393
        %v1395 = vpop.f32.mrf.mxu0
        %1396 = vmatprep.mubr.f32.mxu0 %v430
        %1397 = vmatmul.mubr.f32.gmra.mxu0 %v429
        %v1398 = vpop.f32.mrf.mxu0
        %v1399 = vadd.f32 %v1134, %v1398
        %v1400 = vpop.f32.mrf.mxu0
        %1401 = vmatprep.mubr.f32.mxu0 %v438
        %1402 = vmatmul.mubr.f32.gmra.mxu0 %v437
        %v1403 = vpop.f32.mrf.mxu0
        %v1404 = vadd.f32 %v1139, %v1403
        %v1405 = vpop.f32.mrf.mxu0
        %1406 = vmatprep.mubr.f32.mxu0 %v446
        %1407 = vmatmul.mubr.f32.gmra.mxu0 %v445
        %v1408 = vpop.f32.mrf.mxu0
        %v1409 = vadd.f32 %v1144, %v1408
        %v1410 = vpop.f32.mrf.mxu0
        %1411 = vmatprep.mubr.f32.mxu0 %v454
        %1412 = vmatmul.mubr.f32.gmra.mxu0 %v453
        %v1413 = vpop.f32.mrf.mxu0
        %v1414 = vadd.f32 %v1149, %v1413
        %v1415 = vpop.f32.mrf.mxu0
        %1416 = vmatprep.mubr.f32.mxu0 %v462
        %1417 = vmatmul.mubr.f32.gmra.mxu0 %v461
        %v1418 = vpop.f32.mrf.mxu0
        %v1419 = vadd.f32 %v1154, %v1418
        %v1420 = vpop.f32.mrf.mxu0
        %1421 = vmatprep.mubr.f32.mxu0 %v470
        %1422 = vmatmul.mubr.f32.gmra.mxu0 %v469
        %v1423 = vpop.f32.mrf.mxu0
        %v1424 = vadd.f32 %v1159, %v1423
        %v1425 = vpop.f32.mrf.mxu0
        %1426 = vmatprep.mubr.f32.mxu0 %v478
        %1427 = vmatmul.mubr.f32.gmra.mxu0 %v477
        %v1428 = vpop.f32.mrf.mxu0
        %v1429 = vadd.f32 %v1164, %v1428
        %v1430 = vpop.f32.mrf.mxu0
        %1431 = vmatprep.mubr.f32.mxu0 %v486
        %1432 = vmatmul.mubr.f32.gmra.mxu0 %v485
        %v1433 = vpop.f32.mrf.mxu0
        %v1434 = vadd.f32 %v1169, %v1433
        %v1435 = vpop.f32.mrf.mxu0
        %1436 = vmatprep.mubr.f32.mxu0 %v494
        %1437 = vmatmul.mubr.f32.gmra.mxu0 %v493
        %v1438 = vpop.f32.mrf.mxu0
        %v1439 = vadd.f32 %v1174, %v1438
        %v1440 = vpop.f32.mrf.mxu0
        %1441 = vmatprep.mubr.f32.mxu0 %v502
        %1442 = vmatmul.mubr.f32.gmra.mxu0 %v501
        %v1443 = vpop.f32.mrf.mxu0
        %v1444 = vadd.f32 %v1179, %v1443
        %v1445 = vpop.f32.mrf.mxu0
        %1446 = vmatprep.mubr.f32.mxu0 %v510
        %1447 = vmatmul.mubr.f32.gmra.mxu0 %v509
        %v1448 = vpop.f32.mrf.mxu0
        %v1449 = vadd.f32 %v1184, %v1448
        %v1450 = vpop.f32.mrf.mxu0
        %1451 = vmatprep.mubr.f32.mxu0 %v518
        %1452 = vmatmul.mubr.f32.gmra.mxu0 %v517
        %v1453 = vpop.f32.mrf.mxu0
        %v1454 = vadd.f32 %v1189, %v1453
        %v1455 = vpop.f32.mrf.mxu0
        %1456 = vmatprep.mubr.f32.mxu0 %v526
        %1457 = vmatmul.mubr.f32.gmra.mxu0 %v525
        %v1458 = vpop.f32.mrf.mxu0
        %v1459 = vadd.f32 %v1194, %v1458
        %v1460 = vpop.f32.mrf.mxu0
        %1461 = vmatprep.mubr.f32.mxu0 %v534
        %1462 = vmatmul.mubr.f32.gmra.mxu0 %v533
        %v1463 = vpop.f32.mrf.mxu0
        %v1464 = vadd.f32 %v1199, %v1463
        %v1465 = vpop.f32.mrf.mxu0
        %1466 = vdwg.mxu0
        %1467 = vmatprep.subr.mxu0 0.0
        %1468 = vmatpush1.msra.mxu0 %v648
        %1469 = vmatprep.subr.mxu0 0.0
        %1470 = vmatpush1.msra.mxu0 %v647
        %1471 = vmatprep.subr.mxu0 0.0
        %1472 = vmatpush1.msra.mxu0 %v646
        %1473 = vmatprep.subr.mxu0 0.0
        %1474 = vmatpush1.msra.mxu0 %v645
        %1475 = vmatprep.subr.mxu0 0.0
        %1476 = vmatpush1.msra.mxu0 %v644
        %1477 = vmatprep.subr.mxu0 0.0
        %1478 = vmatpush1.msra.mxu0 %v643
        %1479 = vmatprep.subr.mxu0 0.0
        %1480 = vmatpush1.msra.mxu0 %v642
        %1481 = vmatprep.subr.mxu0 0.0
        %1482 = vmatpush1.msra.mxu0 %v641
        %1483 = vmatprep.subr.mxu0 0.0
        %1484 = vmatpush1.msra.mxu0 %v640
        %1485 = vmatprep.subr.mxu0 0.0
        %1486 = vmatpush1.msra.mxu0 %v639
        %1487 = vmatprep.subr.mxu0 0.0
        %1488 = vmatpush1.msra.mxu0 %v638
        %1489 = vmatprep.subr.mxu0 0.0
        %1490 = vmatpush1.msra.mxu0 %v637
        %1491 = vmatprep.subr.mxu0 0.0
        %1492 = vmatpush1.msra.mxu0 %v636
        %1493 = vmatprep.subr.mxu0 0.0
        %1494 = vmatpush1.msra.mxu0 %v635
        %1495 = vmatprep.subr.mxu0 0.0
        %1496 = vmatpush1.msra.mxu0 %v634
        %1497 = vmatprep.subr.mxu0 0.0
        %1498 = vmatpush1.msra.mxu0 %v633
        %1499 = vmatprep.subr.mxu0 0.0
        %1500 = vmatpush2.msra.mxu0 %v664
        %1501 = vmatprep.subr.mxu0 0.0
        %1502 = vmatpush2.msra.mxu0 %v663
        %1503 = vmatprep.subr.mxu0 0.0
        %1504 = vmatpush2.msra.mxu0 %v662
        %1505 = vmatprep.subr.mxu0 0.0
        %1506 = vmatpush2.msra.mxu0 %v661
        %1507 = vmatprep.subr.mxu0 0.0
        %1508 = vmatpush2.msra.mxu0 %v660
        %1509 = vmatprep.subr.mxu0 0.0
        %1510 = vmatpush2.msra.mxu0 %v659
        %1511 = vmatprep.subr.mxu0 0.0
        %1512 = vmatpush2.msra.mxu0 %v658
        %1513 = vmatprep.subr.mxu0 0.0
        %1514 = vmatpush2.msra.mxu0 %v657
        %1515 = vmatprep.subr.mxu0 0.0
        %1516 = vmatpush2.msra.mxu0 %v656
        %1517 = vmatprep.subr.mxu0 0.0
        %1518 = vmatpush2.msra.mxu0 %v655
        %1519 = vmatprep.subr.mxu0 0.0
        %1520 = vmatpush2.msra.mxu0 %v654
        %1521 = vmatprep.subr.mxu0 0.0
        %1522 = vmatpush2.msra.mxu0 %v653
        %1523 = vmatprep.subr.mxu0 0.0
        %1524 = vmatpush2.msra.mxu0 %v652
        %1525 = vmatprep.subr.mxu0 0.0
        %1526 = vmatpush2.msra.mxu0 %v651
        %1527 = vmatprep.subr.mxu0 0.0
        %1528 = vmatpush2.msra.mxu0 %v650
        %1529 = vmatprep.subr.mxu0 0.0
        %1530 = vmatpush2.msra.mxu0 %v649
        %1531 = vmatprep.mubr.f32.mxu0 %v224
        %1532 = vmatmul.mubr.f32.gmra.mxu0 %v223
        %v1533 = vpop.f32.mrf.mxu0
        %v1534 = vadd.f32 %v1269, %v1533
        %v1535 = vpop.f32.mrf.mxu0
        %1536 = vmatprep.mubr.f32.mxu0 %v232
        %1537 = vmatmul.mubr.f32.gmra.mxu0 %v231
        %v1538 = vpop.f32.mrf.mxu0
        %v1539 = vadd.f32 %v1274, %v1538
        %v1540 = vpop.f32.mrf.mxu0
        %1541 = vmatprep.mubr.f32.mxu0 %v240
        %1542 = vmatmul.mubr.f32.gmra.mxu0 %v239
        %v1543 = vpop.f32.mrf.mxu0
        %v1544 = vadd.f32 %v1279, %v1543
        %v1545 = vpop.f32.mrf.mxu0
        %1546 = vmatprep.mubr.f32.mxu0 %v248
        %1547 = vmatmul.mubr.f32.gmra.mxu0 %v247
        %v1548 = vpop.f32.mrf.mxu0
        %v1549 = vadd.f32 %v1284, %v1548
        %v1550 = vpop.f32.mrf.mxu0
        %1551 = vmatprep.mubr.f32.mxu0 %v256
        %1552 = vmatmul.mubr.f32.gmra.mxu0 %v255
        %v1553 = vpop.f32.mrf.mxu0
        %v1554 = vadd.f32 %v1289, %v1553
        %v1555 = vpop.f32.mrf.mxu0
        %1556 = vmatprep.mubr.f32.mxu0 %v264
        %1557 = vmatmul.mubr.f32.gmra.mxu0 %v263
        %v1558 = vpop.f32.mrf.mxu0
        %v1559 = vadd.f32 %v1294, %v1558
        %v1560 = vpop.f32.mrf.mxu0
        %1561 = vmatprep.mubr.f32.mxu0 %v272
        %1562 = vmatmul.mubr.f32.gmra.mxu0 %v271
        %v1563 = vpop.f32.mrf.mxu0
        %v1564 = vadd.f32 %v1299, %v1563
        %v1565 = vpop.f32.mrf.mxu0
        %1566 = vmatprep.mubr.f32.mxu0 %v280
        %1567 = vmatmul.mubr.f32.gmra.mxu0 %v279
        %v1568 = vpop.f32.mrf.mxu0
        %v1569 = vadd.f32 %v1304, %v1568
        %v1570 = vpop.f32.mrf.mxu0
        %1571 = vmatprep.mubr.f32.mxu0 %v288
        %1572 = vmatmul.mubr.f32.gmra.mxu0 %v287
        %v1573 = vpop.f32.mrf.mxu0
        %v1574 = vadd.f32 %v1309, %v1573
        %v1575 = vpop.f32.mrf.mxu0
        %1576 = vmatprep.mubr.f32.mxu0 %v296
        %1577 = vmatmul.mubr.f32.gmra.mxu0 %v295
        %v1578 = vpop.f32.mrf.mxu0
        %v1579 = vadd.f32 %v1314, %v1578
        %v1580 = vpop.f32.mrf.mxu0
        %1581 = vmatprep.mubr.f32.mxu0 %v304
        %1582 = vmatmul.mubr.f32.gmra.mxu0 %v303
        %v1583 = vpop.f32.mrf.mxu0
        %v1584 = vadd.f32 %v1319, %v1583
        %v1585 = vpop.f32.mrf.mxu0
        %1586 = vmatprep.mubr.f32.mxu0 %v312
        %1587 = vmatmul.mubr.f32.gmra.mxu0 %v311
        %v1588 = vpop.f32.mrf.mxu0
        %v1589 = vadd.f32 %v1324, %v1588
        %v1590 = vpop.f32.mrf.mxu0
        %1591 = vmatprep.mubr.f32.mxu0 %v320
        %1592 = vmatmul.mubr.f32.gmra.mxu0 %v319
        %v1593 = vpop.f32.mrf.mxu0
        %v1594 = vadd.f32 %v1329, %v1593
        %v1595 = vpop.f32.mrf.mxu0
        %1596 = vmatprep.mubr.f32.mxu0 %v328
        %1597 = vmatmul.mubr.f32.gmra.mxu0 %v327
        %v1598 = vpop.f32.mrf.mxu0
        %v1599 = vadd.f32 %v1334, %v1598
        %v1600 = vpop.f32.mrf.mxu0
        %1601 = vmatprep.mubr.f32.mxu0 %v336
        %1602 = vmatmul.mubr.f32.gmra.mxu0 %v335
        %v1603 = vpop.f32.mrf.mxu0
        %v1604 = vadd.f32 %v1339, %v1603
        %v1605 = vpop.f32.mrf.mxu0
        %1606 = vmatprep.mubr.f32.mxu0 %v344
        %1607 = vmatmul.mubr.f32.gmra.mxu0 %v343
        %v1608 = vpop.f32.mrf.mxu0
        %v1609 = vadd.f32 %v1344, %v1608
        %v1610 = vpop.f32.mrf.mxu0
        %1611 = vmatprep.mubr.f32.mxu0 %v352
        %1612 = vmatmul.mubr.f32.gmra.mxu0 %v351
        %v1613 = vpop.f32.mrf.mxu0
        %v1614 = vadd.f32 %v1349, %v1613
        %v1615 = vpop.f32.mrf.mxu0
        %1616 = vmatprep.mubr.f32.mxu0 %v360
        %1617 = vmatmul.mubr.f32.gmra.mxu0 %v359
        %v1618 = vpop.f32.mrf.mxu0
        %v1619 = vadd.f32 %v1354, %v1618
        %v1620 = vpop.f32.mrf.mxu0
        %1621 = vmatprep.mubr.f32.mxu0 %v368
        %1622 = vmatmul.mubr.f32.gmra.mxu0 %v367
        %v1623 = vpop.f32.mrf.mxu0
        %v1624 = vadd.f32 %v1359, %v1623
        %v1625 = vpop.f32.mrf.mxu0
        %1626 = vmatprep.mubr.f32.mxu0 %v376
        %1627 = vmatmul.mubr.f32.gmra.mxu0 %v375
        %v1628 = vpop.f32.mrf.mxu0
        %v1629 = vadd.f32 %v1364, %v1628
        %v1630 = vpop.f32.mrf.mxu0
        %1631 = vmatprep.mubr.f32.mxu0 %v384
        %1632 = vmatmul.mubr.f32.gmra.mxu0 %v383
        %v1633 = vpop.f32.mrf.mxu0
        %v1634 = vadd.f32 %v1369, %v1633
        %v1635 = vpop.f32.mrf.mxu0
        %1636 = vmatprep.mubr.f32.mxu0 %v392
        %1637 = vmatmul.mubr.f32.gmra.mxu0 %v391
        %v1638 = vpop.f32.mrf.mxu0
        %v1639 = vadd.f32 %v1374, %v1638
        %v1640 = vpop.f32.mrf.mxu0
        %1641 = vmatprep.mubr.f32.mxu0 %v400
        %1642 = vmatmul.mubr.f32.gmra.mxu0 %v399
        %v1643 = vpop.f32.mrf.mxu0
        %v1644 = vadd.f32 %v1379, %v1643
        %v1645 = vpop.f32.mrf.mxu0
        %1646 = vmatprep.mubr.f32.mxu0 %v408
        %1647 = vmatmul.mubr.f32.gmra.mxu0 %v407
        %v1648 = vpop.f32.mrf.mxu0
        %v1649 = vadd.f32 %v1384, %v1648
        %v1650 = vpop.f32.mrf.mxu0
        %1651 = vmatprep.mubr.f32.mxu0 %v416
        %1652 = vmatmul.mubr.f32.gmra.mxu0 %v415
        %v1653 = vpop.f32.mrf.mxu0
        %v1654 = vadd.f32 %v1389, %v1653
        %v1655 = vpop.f32.mrf.mxu0
        %1656 = vmatprep.mubr.f32.mxu0 %v424
        %1657 = vmatmul.mubr.f32.gmra.mxu0 %v423
        %v1658 = vpop.f32.mrf.mxu0
        %v1659 = vadd.f32 %v1394, %v1658
        %v1660 = vpop.f32.mrf.mxu0
        %1661 = vmatprep.mubr.f32.mxu0 %v432
        %1662 = vmatmul.mubr.f32.gmra.mxu0 %v431
        %v1663 = vpop.f32.mrf.mxu0
        %v1664 = vadd.f32 %v1399, %v1663
        %v1665 = vpop.f32.mrf.mxu0
        %1666 = vmatprep.mubr.f32.mxu0 %v440
        %1667 = vmatmul.mubr.f32.gmra.mxu0 %v439
        %v1668 = vpop.f32.mrf.mxu0
        %v1669 = vadd.f32 %v1404, %v1668
        %v1670 = vpop.f32.mrf.mxu0
        %1671 = vmatprep.mubr.f32.mxu0 %v448
        %1672 = vmatmul.mubr.f32.gmra.mxu0 %v447
        %v1673 = vpop.f32.mrf.mxu0
        %v1674 = vadd.f32 %v1409, %v1673
        %v1675 = vpop.f32.mrf.mxu0
        %1676 = vmatprep.mubr.f32.mxu0 %v456
        %1677 = vmatmul.mubr.f32.gmra.mxu0 %v455
        %v1678 = vpop.f32.mrf.mxu0
        %v1679 = vadd.f32 %v1414, %v1678
        %v1680 = vpop.f32.mrf.mxu0
        %1681 = vmatprep.mubr.f32.mxu0 %v464
        %1682 = vmatmul.mubr.f32.gmra.mxu0 %v463
        %v1683 = vpop.f32.mrf.mxu0
        %v1684 = vadd.f32 %v1419, %v1683
        %v1685 = vpop.f32.mrf.mxu0
        %1686 = vmatprep.mubr.f32.mxu0 %v472
        %1687 = vmatmul.mubr.f32.gmra.mxu0 %v471
        %v1688 = vpop.f32.mrf.mxu0
        %v1689 = vadd.f32 %v1424, %v1688
        %v1690 = vpop.f32.mrf.mxu0
        %1691 = vmatprep.mubr.f32.mxu0 %v480
        %1692 = vmatmul.mubr.f32.gmra.mxu0 %v479
        %v1693 = vpop.f32.mrf.mxu0
        %v1694 = vadd.f32 %v1429, %v1693
        %v1695 = vpop.f32.mrf.mxu0
        %1696 = vmatprep.mubr.f32.mxu0 %v488
        %1697 = vmatmul.mubr.f32.gmra.mxu0 %v487
        %v1698 = vpop.f32.mrf.mxu0
        %v1699 = vadd.f32 %v1434, %v1698
        %v1700 = vpop.f32.mrf.mxu0
        %1701 = vmatprep.mubr.f32.mxu0 %v496
        %1702 = vmatmul.mubr.f32.gmra.mxu0 %v495
        %v1703 = vpop.f32.mrf.mxu0
        %v1704 = vadd.f32 %v1439, %v1703
        %v1705 = vpop.f32.mrf.mxu0
        %1706 = vmatprep.mubr.f32.mxu0 %v504
        %1707 = vmatmul.mubr.f32.gmra.mxu0 %v503
        %v1708 = vpop.f32.mrf.mxu0
        %v1709 = vadd.f32 %v1444, %v1708
        %v1710 = vpop.f32.mrf.mxu0
        %1711 = vmatprep.mubr.f32.mxu0 %v512
        %1712 = vmatmul.mubr.f32.gmra.mxu0 %v511
        %v1713 = vpop.f32.mrf.mxu0
        %v1714 = vadd.f32 %v1449, %v1713
        %v1715 = vpop.f32.mrf.mxu0
        %1716 = vmatprep.mubr.f32.mxu0 %v520
        %1717 = vmatmul.mubr.f32.gmra.mxu0 %v519
        %v1718 = vpop.f32.mrf.mxu0
        %v1719 = vadd.f32 %v1454, %v1718
        %v1720 = vpop.f32.mrf.mxu0
        %1721 = vmatprep.mubr.f32.mxu0 %v528
        %1722 = vmatmul.mubr.f32.gmra.mxu0 %v527
        %v1723 = vpop.f32.mrf.mxu0
        %v1724 = vadd.f32 %v1459, %v1723
        %v1725 = vpop.f32.mrf.mxu0
        %1726 = vmatprep.mubr.f32.mxu0 %v536
        %1727 = vmatmul.mubr.f32.gmra.mxu0 %v535
        %v1728 = vpop.f32.mrf.mxu0
        %v1729 = vadd.f32 %v1464, %v1728
        %v1730 = vpop.f32.mrf.mxu0
        %1731 = vdwg.mxu0
        %vm1732 = vcmask 261120
        %1733 = vst.msk [vmem:[%s205] sm:$0xff] %vm1732, %v1534
        %1734 = vst.msk [vmem:[%s205 + $0x8] sm:$0xff] %vm1732, %v1539
        %1735 = vst.msk [vmem:[%s205 + $0x10] sm:$0xff] %vm1732, %v1544
        %1736 = vst.msk [vmem:[%s205 + $0x18] sm:$0xff] %vm1732, %v1549
        %1737 = vst.msk [vmem:[%s205 + $0x20] sm:$0xff] %vm1732, %v1554
        %1738 = vst.msk [vmem:[%s205 + $0x28] sm:$0xff] %vm1732, %v1559
        %1739 = vst.msk [vmem:[%s205 + $0x30] sm:$0xff] %vm1732, %v1564
        %1740 = vst.msk [vmem:[%s205 + $0x38] sm:$0xff] %vm1732, %v1569
        %1741 = vst.msk [vmem:[%s205 + $0x40] sm:$0xff] %vm1732, %v1574
        %1742 = vst.msk [vmem:[%s205 + $0x48] sm:$0xff] %vm1732, %v1579
        %1743 = vst.msk [vmem:[%s205 + $0x50] sm:$0xff] %vm1732, %v1584
        %1744 = vst.msk [vmem:[%s205 + $0x58] sm:$0xff] %vm1732, %v1589
        %1745 = vst.msk [vmem:[%s205 + $0x60] sm:$0xff] %vm1732, %v1594
        %1746 = vst.msk [vmem:[%s205 + $0x68] sm:$0xff] %vm1732, %v1599
        %1747 = vst.msk [vmem:[%s205 + $0x70] sm:$0xff] %vm1732, %v1604
        %1748 = vst.msk [vmem:[%s205 + $0x78] sm:$0xff] %vm1732, %v1609
        %1749 = vst.msk [vmem:[%s205 + $0x80] sm:$0xff] %vm1732, %v1614
        %1750 = vst.msk [vmem:[%s205 + $0x88] sm:$0xff] %vm1732, %v1619
        %1751 = vst.msk [vmem:[%s205 + $0x90] sm:$0xff] %vm1732, %v1624
        %1752 = vst.msk [vmem:[%s205 + $0x98] sm:$0xff] %vm1732, %v1629
        %1753 = vst.msk [vmem:[%s205 + $0xa0] sm:$0xff] %vm1732, %v1634
        %1754 = vst.msk [vmem:[%s205 + $0xa8] sm:$0xff] %vm1732, %v1639
        %1755 = vst.msk [vmem:[%s205 + $0xb0] sm:$0xff] %vm1732, %v1644
        %1756 = vst.msk [vmem:[%s205 + $0xb8] sm:$0xff] %vm1732, %v1649
        %1757 = vst.msk [vmem:[%s205 + $0xc0] sm:$0xff] %vm1732, %v1654
        %1758 = vst.msk [vmem:[%s205 + $0xc8] sm:$0xff] %vm1732, %v1659
        %1759 = vst.msk [vmem:[%s205 + $0xd0] sm:$0xff] %vm1732, %v1664
        %1760 = vst.msk [vmem:[%s205 + $0xd8] sm:$0xff] %vm1732, %v1669
        %1761 = vst.msk [vmem:[%s205 + $0xe0] sm:$0xff] %vm1732, %v1674
        %1762 = vst.msk [vmem:[%s205 + $0xe8] sm:$0xff] %vm1732, %v1679
        %1763 = vst.msk [vmem:[%s205 + $0xf0] sm:$0xff] %vm1732, %v1684
        %1764 = vst.msk [vmem:[%s205 + $0xf8] sm:$0xff] %vm1732, %v1689
        %1765 = vst.msk [vmem:[%s205 + $0x100] sm:$0xff] %vm1732, %v1694
        %1766 = vst.msk [vmem:[%s205 + $0x108] sm:$0xff] %vm1732, %v1699
        %1767 = vst.msk [vmem:[%s205 + $0x110] sm:$0xff] %vm1732, %v1704
        %1768 = vst.msk [vmem:[%s205 + $0x118] sm:$0xff] %vm1732, %v1709
        %1769 = vst.msk [vmem:[%s205 + $0x120] sm:$0xff] %vm1732, %v1714
        %1770 = vst.msk [vmem:[%s205 + $0x128] sm:$0xff] %vm1732, %v1719
        %1771 = vst.msk [vmem:[%s205 + $0x130] sm:$0xff] %vm1732, %v1724
        %1772 = vst.msk [vmem:[%s205 + $0x138] sm:$0xff] %vm1732, %v1729
        %s1773 = sand.u32 %s94, 1
        %s1774 = sand.u32 %s94, 1
        %s1775 = smul.addr %s1774, 320
        %s1776 = scalar_lea.vmem [#allocation6], %s1775
        // Predicated region
        $region41: #{tpu_custom_call.1} parent=31 // pred_check
          %p1777 = pneg %p104
        $region42: #{tpu_custom_call.1} parent=31 // pred_check_branch
          %1779 = sbr.rel (%p1777) target = $region44
        $region43: #{tpu_custom_call.1} parent=31 // pred_region
          %s1780 = smul.u32 40, %s18
          %s1781 = ssub.s32 79, %s1780
          %p1782 = scmp.lt.s32.totalorder %s1781, 40
          %s1783 = scalar_select %p1782, %s1781, 40
          %s1784 = smul.u32 128, %s1783
          %p1785 = scmp.ne.s32.totalorder 0, %s1784
          %s1786 = smul.addr %s1780, 8
          %s1787 = scalar_lea.vmem %s3, %s1786
          // Predicated region
          $region45: #{tpu_custom_call.1} parent=43 // pred_check
            %p1788 = pneg %p1785
          $region46: #{tpu_custom_call.1} parent=43 // pred_check_branch
            %1790 = sbr.rel (%p1788) target = $region48
          $region47: #{tpu_custom_call.1} parent=43 // pred_region
            // Predicated region
            $region49: #{tpu_custom_call.1} parent=47 // pred_check
              _
            $region50: #{tpu_custom_call.1} parent=47 // pred_check_branch
              %1792 = sbr.rel (0) target = $region52
            $region51: #{tpu_custom_call.1} parent=47 // pred_region
              // Predicated region
              $region71: #{tpu_custom_call.1} parent=51 // pred_check
                _
              $region72: #{tpu_custom_call.1} parent=51 // pred_check_branch
                %1921 = sbr.rel (0) target = $region74
              $region73: #{tpu_custom_call.1} parent=51 // pred_region
                %s1922 = sdiv.u32.pop %s1783, 40
                %s1923 = srem.u32.pop %s1783, 40
                // While loop
                $region75: #{tpu_custom_call.1} parent=73 // loop_pre_header
                  _
                $region76: #{tpu_custom_call.1} parent=73 // loop_header
                  %s1925 = sphi 0, %s1927
                  %p1926 = scmp.ge.s32.totalorder %s1925, %s1922
                  %s1930 = sphi 0, %s2015
                  %s1931 = sphi %s1776, %s2018
                  %s1932 = sphi %s1787, %s2019
                $region77: #{tpu_custom_call.1} parent=73 // loop_header_branch
                  %1929 = sbr.rel (%p1926) target = $region81
                $region78: #{tpu_custom_call.1} parent=73 // loop_body
                  %v1933 = vld [vmem:[%s1931] sm:$0xff]
                  %1934 = vst [vmem:[%s1932] sm:$0xff] %v1933
                  %v1935 = vld [vmem:[%s1931 + $0x8] sm:$0xff]
                  %1936 = vst [vmem:[%s1932 + $0x8] sm:$0xff] %v1935
                  %v1937 = vld [vmem:[%s1931 + $0x10] sm:$0xff]
                  %1938 = vst [vmem:[%s1932 + $0x10] sm:$0xff] %v1937
                  %v1939 = vld [vmem:[%s1931 + $0x18] sm:$0xff]
                  %1940 = vst [vmem:[%s1932 + $0x18] sm:$0xff] %v1939
                  %v1941 = vld [vmem:[%s1931 + $0x20] sm:$0xff]
                  %1942 = vst [vmem:[%s1932 + $0x20] sm:$0xff] %v1941
                  %v1943 = vld [vmem:[%s1931 + $0x28] sm:$0xff]
                  %1944 = vst [vmem:[%s1932 + $0x28] sm:$0xff] %v1943
                  %v1945 = vld [vmem:[%s1931 + $0x30] sm:$0xff]
                  %1946 = vst [vmem:[%s1932 + $0x30] sm:$0xff] %v1945
                  %v1947 = vld [vmem:[%s1931 + $0x38] sm:$0xff]
                  %1948 = vst [vmem:[%s1932 + $0x38] sm:$0xff] %v1947
                  %v1949 = vld [vmem:[%s1931 + $0x40] sm:$0xff]
                  %1950 = vst [vmem:[%s1932 + $0x40] sm:$0xff] %v1949
                  %v1951 = vld [vmem:[%s1931 + $0x48] sm:$0xff]
                  %1952 = vst [vmem:[%s1932 + $0x48] sm:$0xff] %v1951
                  %v1953 = vld [vmem:[%s1931 + $0x50] sm:$0xff]
                  %1954 = vst [vmem:[%s1932 + $0x50] sm:$0xff] %v1953
                  %v1955 = vld [vmem:[%s1931 + $0x58] sm:$0xff]
                  %1956 = vst [vmem:[%s1932 + $0x58] sm:$0xff] %v1955
                  %v1957 = vld [vmem:[%s1931 + $0x60] sm:$0xff]
                  %1958 = vst [vmem:[%s1932 + $0x60] sm:$0xff] %v1957
                  %v1959 = vld [vmem:[%s1931 + $0x68] sm:$0xff]
                  %1960 = vst [vmem:[%s1932 + $0x68] sm:$0xff] %v1959
                  %v1961 = vld [vmem:[%s1931 + $0x70] sm:$0xff]
                  %1962 = vst [vmem:[%s1932 + $0x70] sm:$0xff] %v1961
                  %v1963 = vld [vmem:[%s1931 + $0x78] sm:$0xff]
                  %1964 = vst [vmem:[%s1932 + $0x78] sm:$0xff] %v1963
                  %v1965 = vld [vmem:[%s1931 + $0x80] sm:$0xff]
                  %1966 = vst [vmem:[%s1932 + $0x80] sm:$0xff] %v1965
                  %v1967 = vld [vmem:[%s1931 + $0x88] sm:$0xff]
                  %1968 = vst [vmem:[%s1932 + $0x88] sm:$0xff] %v1967
                  %v1969 = vld [vmem:[%s1931 + $0x90] sm:$0xff]
                  %1970 = vst [vmem:[%s1932 + $0x90] sm:$0xff] %v1969
                  %v1971 = vld [vmem:[%s1931 + $0x98] sm:$0xff]
                  %1972 = vst [vmem:[%s1932 + $0x98] sm:$0xff] %v1971
                  %v1973 = vld [vmem:[%s1931 + $0xa0] sm:$0xff]
                  %1974 = vst [vmem:[%s1932 + $0xa0] sm:$0xff] %v1973
                  %v1975 = vld [vmem:[%s1931 + $0xa8] sm:$0xff]
                  %1976 = vst [vmem:[%s1932 + $0xa8] sm:$0xff] %v1975
                  %v1977 = vld [vmem:[%s1931 + $0xb0] sm:$0xff]
                  %1978 = vst [vmem:[%s1932 + $0xb0] sm:$0xff] %v1977
                  %v1979 = vld [vmem:[%s1931 + $0xb8] sm:$0xff]
                  %1980 = vst [vmem:[%s1932 + $0xb8] sm:$0xff] %v1979
                  %v1981 = vld [vmem:[%s1931 + $0xc0] sm:$0xff]
                  %1982 = vst [vmem:[%s1932 + $0xc0] sm:$0xff] %v1981
                  %v1983 = vld [vmem:[%s1931 + $0xc8] sm:$0xff]
                  %1984 = vst [vmem:[%s1932 + $0xc8] sm:$0xff] %v1983
                  %v1985 = vld [vmem:[%s1931 + $0xd0] sm:$0xff]
                  %1986 = vst [vmem:[%s1932 + $0xd0] sm:$0xff] %v1985
                  %v1987 = vld [vmem:[%s1931 + $0xd8] sm:$0xff]
                  %1988 = vst [vmem:[%s1932 + $0xd8] sm:$0xff] %v1987
                  %v1989 = vld [vmem:[%s1931 + $0xe0] sm:$0xff]
                  %1990 = vst [vmem:[%s1932 + $0xe0] sm:$0xff] %v1989
                  %v1991 = vld [vmem:[%s1931 + $0xe8] sm:$0xff]
                  %1992 = vst [vmem:[%s1932 + $0xe8] sm:$0xff] %v1991
                  %v1993 = vld [vmem:[%s1931 + $0xf0] sm:$0xff]
                  %1994 = vst [vmem:[%s1932 + $0xf0] sm:$0xff] %v1993
                  %v1995 = vld [vmem:[%s1931 + $0xf8] sm:$0xff]
                  %1996 = vst [vmem:[%s1932 + $0xf8] sm:$0xff] %v1995
                  %v1997 = vld [vmem:[%s1931 + $0x100] sm:$0xff]
                  %1998 = vst [vmem:[%s1932 + $0x100] sm:$0xff] %v1997
                  %v1999 = vld [vmem:[%s1931 + $0x108] sm:$0xff]
                  %2000 = vst [vmem:[%s1932 + $0x108] sm:$0xff] %v1999
                  %v2001 = vld [vmem:[%s1931 + $0x110] sm:$0xff]
                  %2002 = vst [vmem:[%s1932 + $0x110] sm:$0xff] %v2001
                  %v2003 = vld [vmem:[%s1931 + $0x118] sm:$0xff]
                  %2004 = vst [vmem:[%s1932 + $0x118] sm:$0xff] %v2003
                  %v2005 = vld [vmem:[%s1931 + $0x120] sm:$0xff]
                  %2006 = vst [vmem:[%s1932 + $0x120] sm:$0xff] %v2005
                  %v2007 = vld [vmem:[%s1931 + $0x128] sm:$0xff]
                  %2008 = vst [vmem:[%s1932 + $0x128] sm:$0xff] %v2007
                  %v2009 = vld [vmem:[%s1931 + $0x130] sm:$0xff]
                  %2010 = vst [vmem:[%s1932 + $0x130] sm:$0xff] %v2009
                  %v2011 = vld [vmem:[%s1931 + $0x138] sm:$0xff]
                  %2012 = vst [vmem:[%s1932 + $0x138] sm:$0xff] %v2011
                  %s2013 = sadd.s32 1, %s1930
                  %p2014 = scmp.ge.s32.totalorder %s2013, %s1922
                  %s2015 = scalar_select %p2014, 0, %s2013
                  %s2016 = smul.u32 %s2015, 320
                  %s2017 = smul.u32 %s2015, 320
                  %s2018 = scalar_lea.vmem %s1776, %s2016 [#allocation6]
                  %s2019 = scalar_lea.vmem %s1787, %s2017
                $region79: #{tpu_custom_call.1} parent=73 // loop_footer
                  %s1927 = sadd.s32 %s1925, 1
                $region80: #{tpu_custom_call.1} parent=73 // loop_footer_branch
                  %1924 = sbr.rel target = $region76
                $region81: #{tpu_custom_call.1} parent=73 // loop_exit
                  _
                %s2020 = sdiv.u32.pop %s1783, 40
                %s2021 = srem.u32.pop %s1783, 40
                %s2022 = smul.u32 %s2020, 40
                %s2023 = smul.u32 8, %s2022
                %s2024 = scalar_lea.vmem %s1776, %s2023 [#allocation6]
                %s2025 = smul.u32 8, %s2022
                %s2026 = scalar_lea.vmem %s1787, %s2025
                // While loop
                $region82: #{tpu_custom_call.1} parent=73 // loop_pre_header
                  _
                $region83: #{tpu_custom_call.1} parent=73 // loop_header
                  %s2028 = sphi 0, %s2030
                  %p2029 = scmp.ge.s32.totalorder %s2028, %s2021
                  %s2033 = sphi 0, %s2040
                  %s2034 = sphi %s2024, %s2043
                  %s2035 = sphi %s2026, %s2044
                $region84: #{tpu_custom_call.1} parent=73 // loop_header_branch
                  %2032 = sbr.rel (%p2029) target = $region88
                $region85: #{tpu_custom_call.1} parent=73 // loop_body
                  %v2036 = vld [vmem:[%s2034] sm:$0xff]
                  %2037 = vst [vmem:[%s2035] sm:$0xff] %v2036
                  %s2038 = sadd.s32 1, %s2033
                  %p2039 = scmp.ge.s32.totalorder %s2038, %s2021
                  %s2040 = scalar_select %p2039, 0, %s2038
                  %s2041 = smul.u32 %s2040, 8
                  %s2042 = smul.u32 %s2040, 8
                  %s2043 = scalar_lea.vmem %s2024, %s2041 [#allocation6]
                  %s2044 = scalar_lea.vmem %s2026, %s2042
                $region86: #{tpu_custom_call.1} parent=73 // loop_footer
                  %s2030 = sadd.s32 %s2028, 1
                $region87: #{tpu_custom_call.1} parent=73 // loop_footer_branch
                  %2027 = sbr.rel target = $region83
                $region88: #{tpu_custom_call.1} parent=73 // loop_exit
                  _
              $region74: #{tpu_custom_call.1} parent=51 // pred_fallthru
                _
              // Predicated region
              $region89: #{tpu_custom_call.1} parent=51 // pred_check
                _
              $region90: #{tpu_custom_call.1} parent=51 // pred_check_branch
                %2046 = sbr.rel target = $region92
              $region91: #{tpu_custom_call.1} parent=51 // pred_region
                _
              $region92: #{tpu_custom_call.1} parent=51 // pred_fallthru
                _
            $region52: #{tpu_custom_call.1} parent=47 // pred_fallthru
              _
            // Predicated region
            $region53: #{tpu_custom_call.1} parent=47 // pred_check
              _
            $region54: #{tpu_custom_call.1} parent=47 // pred_check_branch
              %1794 = sbr.rel target = $region56
            $region55: #{tpu_custom_call.1} parent=47 // pred_region
              %s1796 = ssub.s32 256, 1
              %s1797 = sdiv.u32.pop %s1783, 40
              %s1798 = srem.u32.pop %s1783, 40
              // While loop
              $region57: #{tpu_custom_call.1} parent=55 // loop_pre_header
                _
              $region58: #{tpu_custom_call.1} parent=55 // loop_header
                %s1800 = sphi 0, %s1802
                %p1801 = scmp.ge.s32.totalorder %s1800, %s1797
                %s1805 = sphi 0, %s1890
                %s1806 = sphi %s1776, %s1893
                %s1807 = sphi %s1787, %s1894
              $region59: #{tpu_custom_call.1} parent=55 // loop_header_branch
                %1804 = sbr.rel (%p1801) target = $region63
              $region60: #{tpu_custom_call.1} parent=55 // loop_body
                %v1808 = vld [vmem:[%s1806] sm:%s1796]
                %1809 = vst [vmem:[%s1807] sm:%s1796] %v1808
                %v1810 = vld [vmem:[%s1806 + $0x8] sm:%s1796]
                %1811 = vst [vmem:[%s1807 + $0x8] sm:%s1796] %v1810
                %v1812 = vld [vmem:[%s1806 + $0x10] sm:%s1796]
                %1813 = vst [vmem:[%s1807 + $0x10] sm:%s1796] %v1812
                %v1814 = vld [vmem:[%s1806 + $0x18] sm:%s1796]
                %1815 = vst [vmem:[%s1807 + $0x18] sm:%s1796] %v1814
                %v1816 = vld [vmem:[%s1806 + $0x20] sm:%s1796]
                %1817 = vst [vmem:[%s1807 + $0x20] sm:%s1796] %v1816
                %v1818 = vld [vmem:[%s1806 + $0x28] sm:%s1796]
                %1819 = vst [vmem:[%s1807 + $0x28] sm:%s1796] %v1818
                %v1820 = vld [vmem:[%s1806 + $0x30] sm:%s1796]
                %1821 = vst [vmem:[%s1807 + $0x30] sm:%s1796] %v1820
                %v1822 = vld [vmem:[%s1806 + $0x38] sm:%s1796]
                %1823 = vst [vmem:[%s1807 + $0x38] sm:%s1796] %v1822
                %v1824 = vld [vmem:[%s1806 + $0x40] sm:%s1796]
                %1825 = vst [vmem:[%s1807 + $0x40] sm:%s1796] %v1824
                %v1826 = vld [vmem:[%s1806 + $0x48] sm:%s1796]
                %1827 = vst [vmem:[%s1807 + $0x48] sm:%s1796] %v1826
                %v1828 = vld [vmem:[%s1806 + $0x50] sm:%s1796]
                %1829 = vst [vmem:[%s1807 + $0x50] sm:%s1796] %v1828
                %v1830 = vld [vmem:[%s1806 + $0x58] sm:%s1796]
                %1831 = vst [vmem:[%s1807 + $0x58] sm:%s1796] %v1830
                %v1832 = vld [vmem:[%s1806 + $0x60] sm:%s1796]
                %1833 = vst [vmem:[%s1807 + $0x60] sm:%s1796] %v1832
                %v1834 = vld [vmem:[%s1806 + $0x68] sm:%s1796]
                %1835 = vst [vmem:[%s1807 + $0x68] sm:%s1796] %v1834
                %v1836 = vld [vmem:[%s1806 + $0x70] sm:%s1796]
                %1837 = vst [vmem:[%s1807 + $0x70] sm:%s1796] %v1836
                %v1838 = vld [vmem:[%s1806 + $0x78] sm:%s1796]
                %1839 = vst [vmem:[%s1807 + $0x78] sm:%s1796] %v1838
                %v1840 = vld [vmem:[%s1806 + $0x80] sm:%s1796]
                %1841 = vst [vmem:[%s1807 + $0x80] sm:%s1796] %v1840
                %v1842 = vld [vmem:[%s1806 + $0x88] sm:%s1796]
                %1843 = vst [vmem:[%s1807 + $0x88] sm:%s1796] %v1842
                %v1844 = vld [vmem:[%s1806 + $0x90] sm:%s1796]
                %1845 = vst [vmem:[%s1807 + $0x90] sm:%s1796] %v1844
                %v1846 = vld [vmem:[%s1806 + $0x98] sm:%s1796]
                %1847 = vst [vmem:[%s1807 + $0x98] sm:%s1796] %v1846
                %v1848 = vld [vmem:[%s1806 + $0xa0] sm:%s1796]
                %1849 = vst [vmem:[%s1807 + $0xa0] sm:%s1796] %v1848
                %v1850 = vld [vmem:[%s1806 + $0xa8] sm:%s1796]
                %1851 = vst [vmem:[%s1807 + $0xa8] sm:%s1796] %v1850
                %v1852 = vld [vmem:[%s1806 + $0xb0] sm:%s1796]
                %1853 = vst [vmem:[%s1807 + $0xb0] sm:%s1796] %v1852
                %v1854 = vld [vmem:[%s1806 + $0xb8] sm:%s1796]
                %1855 = vst [vmem:[%s1807 + $0xb8] sm:%s1796] %v1854
                %v1856 = vld [vmem:[%s1806 + $0xc0] sm:%s1796]
                %1857 = vst [vmem:[%s1807 + $0xc0] sm:%s1796] %v1856
                %v1858 = vld [vmem:[%s1806 + $0xc8] sm:%s1796]
                %1859 = vst [vmem:[%s1807 + $0xc8] sm:%s1796] %v1858
                %v1860 = vld [vmem:[%s1806 + $0xd0] sm:%s1796]
                %1861 = vst [vmem:[%s1807 + $0xd0] sm:%s1796] %v1860
                %v1862 = vld [vmem:[%s1806 + $0xd8] sm:%s1796]
                %1863 = vst [vmem:[%s1807 + $0xd8] sm:%s1796] %v1862
                %v1864 = vld [vmem:[%s1806 + $0xe0] sm:%s1796]
                %1865 = vst [vmem:[%s1807 + $0xe0] sm:%s1796] %v1864
                %v1866 = vld [vmem:[%s1806 + $0xe8] sm:%s1796]
                %1867 = vst [vmem:[%s1807 + $0xe8] sm:%s1796] %v1866
                %v1868 = vld [vmem:[%s1806 + $0xf0] sm:%s1796]
                %1869 = vst [vmem:[%s1807 + $0xf0] sm:%s1796] %v1868
                %v1870 = vld [vmem:[%s1806 + $0xf8] sm:%s1796]
                %1871 = vst [vmem:[%s1807 + $0xf8] sm:%s1796] %v1870
                %v1872 = vld [vmem:[%s1806 + $0x100] sm:%s1796]
                %1873 = vst [vmem:[%s1807 + $0x100] sm:%s1796] %v1872
                %v1874 = vld [vmem:[%s1806 + $0x108] sm:%s1796]
                %1875 = vst [vmem:[%s1807 + $0x108] sm:%s1796] %v1874
                %v1876 = vld [vmem:[%s1806 + $0x110] sm:%s1796]
                %1877 = vst [vmem:[%s1807 + $0x110] sm:%s1796] %v1876
                %v1878 = vld [vmem:[%s1806 + $0x118] sm:%s1796]
                %1879 = vst [vmem:[%s1807 + $0x118] sm:%s1796] %v1878
                %v1880 = vld [vmem:[%s1806 + $0x120] sm:%s1796]
                %1881 = vst [vmem:[%s1807 + $0x120] sm:%s1796] %v1880
                %v1882 = vld [vmem:[%s1806 + $0x128] sm:%s1796]
                %1883 = vst [vmem:[%s1807 + $0x128] sm:%s1796] %v1882
                %v1884 = vld [vmem:[%s1806 + $0x130] sm:%s1796]
                %1885 = vst [vmem:[%s1807 + $0x130] sm:%s1796] %v1884
                %v1886 = vld [vmem:[%s1806 + $0x138] sm:%s1796]
                %1887 = vst [vmem:[%s1807 + $0x138] sm:%s1796] %v1886
                %s1888 = sadd.s32 1, %s1805
                %p1889 = scmp.ge.s32.totalorder %s1888, %s1797
                %s1890 = scalar_select %p1889, 0, %s1888
                %s1891 = smul.u32 %s1890, 320
                %s1892 = smul.u32 %s1890, 320
                %s1893 = scalar_lea.vmem %s1776, %s1891 [#allocation6]
                %s1894 = scalar_lea.vmem %s1787, %s1892
              $region61: #{tpu_custom_call.1} parent=55 // loop_footer
                %s1802 = sadd.s32 %s1800, 1
              $region62: #{tpu_custom_call.1} parent=55 // loop_footer_branch
                %1799 = sbr.rel target = $region58
              $region63: #{tpu_custom_call.1} parent=55 // loop_exit
                _
              %s1895 = sdiv.u32.pop %s1783, 40
              %s1896 = srem.u32.pop %s1783, 40
              %s1897 = smul.u32 %s1895, 40
              %s1898 = smul.u32 8, %s1897
              %s1899 = scalar_lea.vmem %s1776, %s1898 [#allocation6]
              %s1900 = smul.u32 8, %s1897
              %s1901 = scalar_lea.vmem %s1787, %s1900
              // While loop
              $region64: #{tpu_custom_call.1} parent=55 // loop_pre_header
                _
              $region65: #{tpu_custom_call.1} parent=55 // loop_header
                %s1903 = sphi 0, %s1905
                %p1904 = scmp.ge.s32.totalorder %s1903, %s1896
                %s1908 = sphi 0, %s1915
                %s1909 = sphi %s1899, %s1918
                %s1910 = sphi %s1901, %s1919
              $region66: #{tpu_custom_call.1} parent=55 // loop_header_branch
                %1907 = sbr.rel (%p1904) target = $region70
              $region67: #{tpu_custom_call.1} parent=55 // loop_body
                %v1911 = vld [vmem:[%s1909] sm:%s1796]
                %1912 = vst [vmem:[%s1910] sm:%s1796] %v1911
                %s1913 = sadd.s32 1, %s1908
                %p1914 = scmp.ge.s32.totalorder %s1913, %s1896
                %s1915 = scalar_select %p1914, 0, %s1913
                %s1916 = smul.u32 %s1915, 8
                %s1917 = smul.u32 %s1915, 8
                %s1918 = scalar_lea.vmem %s1899, %s1916 [#allocation6]
                %s1919 = scalar_lea.vmem %s1901, %s1917
              $region68: #{tpu_custom_call.1} parent=55 // loop_footer
                %s1905 = sadd.s32 %s1903, 1
              $region69: #{tpu_custom_call.1} parent=55 // loop_footer_branch
                %1902 = sbr.rel target = $region65
              $region70: #{tpu_custom_call.1} parent=55 // loop_exit
                _
            $region56: #{tpu_custom_call.1} parent=47 // pred_fallthru
              _
          $region48: #{tpu_custom_call.1} parent=43 // pred_fallthru
            _
          %2047 = vnop
        $region44: #{tpu_custom_call.1} parent=31 // pred_fallthru
          _
      $region32: #{tpu_custom_call.1} parent=5 // pred_fallthru
        _
      %p2048 = scmp.le.s32.totalorder 2, %s13
      // Predicated region
      $region93: #{tpu_custom_call.1} parent=5 // pred_check
        %p2049 = pneg %p2048
      $region94: #{tpu_custom_call.1} parent=5 // pred_check_branch
        %2051 = sbr.rel (%p2049) target = $region96
      $region95: #{tpu_custom_call.1} parent=5 // pred_region
        %s2052 = ssub.s32 %s13, 2
        // Predicated region
        $region97: #{tpu_custom_call.1} parent=95 // pred_check
          %p2053 = pneg %p110
        $region98: #{tpu_custom_call.1} parent=95 // pred_check_branch
          %2055 = sbr.rel (%p2053) target = $region100
        $region99: #{tpu_custom_call.1} parent=95 // pred_region
          %s2056 = sand.u32 %s95, 1
          %s2057 = sand.u32 %s95, 1
          %s2058 = smul.addr %s2057, 320
          %s2059 = scalar_lea.vmem [#allocation6], %s2058
        $region100: #{tpu_custom_call.1} parent=95 // pred_fallthru
          _
      $region96: #{tpu_custom_call.1} parent=5 // pred_fallthru
        _
    $region6: #{tpu_custom_call.1} parent=1 // loop_footer
      %s17 = sadd.s32 1, %s13
    $region7: #{tpu_custom_call.1} parent=1 // loop_footer_branch
      %12 = sbr.rel target = $region3
    $region8: #{tpu_custom_call.1} parent=1 // loop_exit
      _
    %2060 = vsyncpa [#allocation3], 1
    %s2061 = scalar_lea.sflag [#allocation3], 1
    %2062 = vsyncpa %s2061, 1
    %2063 = vsyncpa [#allocation5], 1

</llo_original>
